<compile_context>
chip_gen: v7x
topology: tpu7x:2x2x1
jax: 0.10.0
libtpu: 0.0.40
codegen_flags: <defaults>
</compile_context>

<pallas_src>
import functools

import numpy as np
import jax
import jax.numpy as jnp
from jax import lax
from jax.experimental import pallas as pl
from jax.experimental.pallas import tpu as pltpu

EPS = 1e-5          # InstanceNorm eps (PyTorch default)
SNAKE_EPS = 1e-9    # guard on 1/alpha

# Column layout of the packed per-channel parameter slab (C, NCOL).
_A1, _IA1, _B1, _G2, _BE2, _A2, _IA2, _B2, _G3, _BE3 = range(10)
NCOL = 10


def _tpu_vmem_capacity_bytes():
    try:
        cap = getattr(pltpu.get_tpu_info(), "vmem_capacity_bytes", None)
        if cap:
            return int(cap)
    except Exception:
        pass
    return 64 * 1024 * 1024   # conservative fallback (v7x-sized)


# ----------------------------- traced kernel helpers -------------------------

def _snake(x, alpha, inv_alpha):
    s = jnp.sin(alpha * x)
    return x + inv_alpha * (s * s)


def _instance_norm(x, gamma, beta, inv_len):
    # Single-pass biased stats over the lane (length) axis; var clamped >= 0.
    s = jnp.sum(x, axis=1, keepdims=True)
    ss = jnp.sum(x * x, axis=1, keepdims=True)
    mean = s * inv_len
    var = jnp.maximum(ss * inv_len - mean * mean, 0.0)
    scale = lax.rsqrt(var + EPS) * gamma
    return (x - mean) * scale + beta


def _conv_full(h, w_ref, bias, lane, *, ksize, dilation, pad, length,
               matmul_dtype, fuse_im2col):
    """Conv1d on a full resident (C, L) slab (zero padding at both ends)."""
    hm = h.astype(matmul_dtype)
    taps = []
    acc = None
    for k in range(ksize):                               # static unroll
        off = k * dilation - pad
        shift = (-off) % length
        t = hm if shift == 0 else pltpu.roll(hm, shift=shift, axis=1)
        if off > 0:
            t = jnp.where(lane < (length - off), t, jnp.zeros_like(t))
        elif off < 0:
            t = jnp.where(lane >= (-off), t, jnp.zeros_like(t))
        if fuse_im2col:
            taps.append(t)
        else:
            acc_k = jnp.dot(w_ref[k], t, preferred_element_type=jnp.float32)
            acc = acc_k if acc is None else acc + acc_k
    if fuse_im2col:
        im2col = jnp.concatenate(taps, axis=0)           # (K*Cin, L)
        acc = jnp.dot(w_ref[...], im2col, preferred_element_type=jnp.float32)
    return acc + bias


def _conv_tiled(hc, hp, hn, w_ref, bias, lane, *, ksize, dilation, pad,
                tile_l, matmul_dtype):
    """Conv1d on one L tile; hp/hn are the (already activated, edge-zeroed)
    previous / next tiles supplying halo lanes.  Per-tap accumulated matmuls
    (no im2col materialization -> minimal VMEM)."""
    del matmul_dtype  # inputs are already cast by the caller
    acc = None
    for k in range(ksize):
        off = k * dilation - pad
        if off == 0:
            t = hc
        else:
            shift = (-off) % tile_l
            rc = pltpu.roll(hc, shift=shift, axis=1)
            if off < 0:
                rb = pltpu.roll(hp, shift=shift, axis=1)
                t = jnp.where(lane >= (-off), rc, rb)
            else:
                rb = pltpu.roll(hn, shift=shift, axis=1)
                t = jnp.where(lane < (tile_l - off), rc, rb)
        acc_k = jnp.dot(w_ref[k], t, preferred_element_type=jnp.float32)
        acc = acc_k if acc is None else acc + acc_k
    return acc + bias


def _tile_stats(y):
    return jnp.concatenate([jnp.sum(y, axis=1, keepdims=True),
                            jnp.sum(y * y, axis=1, keepdims=True)], axis=1)


# ----------------------------- fused (single-slab) kernel --------------------

def fused_block_kernel(x_ref, p_ref, w1_ref, w2_ref, o_ref, *,
                       ksize, dilation, pad1, pad2, matmul_dtype,
                       fuse_im2col):
    x = x_ref[0]                                         # (C, L) f32
    length = x.shape[1]
    inv_len = 1.0 / float(length)
    p = p_ref[...]
    col = lambda j: p[:, j:j + 1]
    lane = lax.broadcasted_iota(jnp.int32, (1, length), 1)   # hoisted once

    h = _snake(x, col(_A1), col(_IA1))
    h = _conv_full(h, w1_ref, col(_B1), lane, ksize=ksize, dilation=dilation,
                   pad=pad1, length=length, matmul_dtype=matmul_dtype,
                   fuse_im2col=fuse_im2col)
    h = _instance_norm(h, col(_G2), col(_BE2), inv_len)
    h = _snake(h, col(_A2), col(_IA2))
    h = _conv_full(h, w2_ref, col(_B2), lane, ksize=ksize, dilation=1,
                   pad=pad2, length=length, matmul_dtype=matmul_dtype,
                   fuse_im2col=fuse_im2col)
    h = _instance_norm(h, col(_G3), col(_BE3), inv_len)
    o_ref[0] = (x + h).astype(o_ref.dtype)               # residual add


# ----------------------------- tiled three-pass kernels ----------------------

def pass1_kernel(prev_ids, next_ids, xp_ref, xc_ref, xn_ref, p_ref, w1_ref,
                 y1_ref, st_ref, *, ksize, dilation, pad, matmul_dtype):
    del prev_ids, next_ids                               # used by index_maps
    i = pl.program_id(1)
    nt = pl.num_programs(1)
    tile_l = xc_ref.shape[2]
    p = p_ref[...]
    col = lambda j: p[:, j:j + 1]
    lane = lax.broadcasted_iota(jnp.int32, (1, tile_l), 1)
    a, ia = col(_A1), col(_IA1)
    not_first = (i > 0).astype(jnp.float32)
    not_last = (i < nt - 1).astype(jnp.float32)

    hc = _snake(xc_ref[0], a, ia).astype(matmul_dtype)
    hp = (not_first * _snake(xp_ref[0], a, ia)).astype(matmul_dtype)
    hn = (not_last * _snake(xn_ref[0], a, ia)).astype(matmul_dtype)

    y = _conv_tiled(hc, hp, hn, w1_ref, col(_B1), lane, ksize=ksize,
                    dilation=dilation, pad=pad, tile_l=tile_l,
                    matmul_dtype=matmul_dtype)
    y1_ref[0] = y.astype(y1_ref.dtype)
    st_ref[0, 0] = _tile_stats(y)


def pass2_kernel(prev_ids, next_ids, yp_ref, yc_ref, yn_ref, aff_ref, p_ref,
                 w2_ref, y2_ref, st_ref, *, ksize, pad, matmul_dtype):
    del prev_ids, next_ids
    i = pl.program_id(1)
    nt = pl.num_programs(1)
    tile_l = yc_ref.shape[2]
    p = p_ref[...]
    col = lambda j: p[:, j:j + 1]
    lane = lax.broadcasted_iota(jnp.int32, (1, tile_l), 1)
    aff = aff_ref[0]
    scale, shift = aff[:, 0:1], aff[:, 1:2]              # folded In2 affine
    a, ia = col(_A2), col(_IA2)
    not_first = (i > 0).astype(jnp.float32)
    not_last = (i < nt - 1).astype(jnp.float32)

    def act(v):                                          # In2-norm + snake2
        return _snake(v * scale + shift, a, ia)

    hc = act(yc_ref[0]).astype(matmul_dtype)
    hp = (not_first * act(yp_ref[0])).astype(matmul_dtype)
    hn = (not_last * act(yn_ref[0])).astype(matmul_dtype)

    y = _conv_tiled(hc, hp, hn, w2_ref, col(_B2), lane, ksize=ksize,
                    dilation=1, pad=pad, tile_l=tile_l,
                    matmul_dtype=matmul_dtype)
    y2_ref[0] = y.astype(y2_ref.dtype)
    st_ref[0, 0] = _tile_stats(y)


def pass3_kernel(x_ref, y2_ref, aff_ref, o_ref):
    aff = aff_ref[0]
    scale, shift = aff[:, 0:1], aff[:, 1:2]              # folded ln3 affine
    o_ref[0] = (x_ref[0] + y2_ref[0] * scale + shift).astype(o_ref.dtype)


# ----------------------------- wrapper ----------------------------------------

def _fold_weight_acc(w, matmul_dtype):
    # (Cout, Cin, K) -> (K, Cout, Cin), one matrix per tap.
    return jnp.transpose(w, (2, 0, 1)).astype(matmul_dtype)


def _fold_weight_im2col(w, matmul_dtype):
    # (Cout, Cin, K) -> (Cout, K*Cin), column index = k*Cin + cin.
    return (jnp.transpose(w, (0, 2, 1)).reshape(w.shape[0], -1)
            .astype(matmul_dtype))


def _pack_params(params):
    cols = [params["a1"], 1.0 / (params["a1"] + SNAKE_EPS), params["b1"],
            params["g2"], params["be2"],
            params["a2"], 1.0 / (params["a2"] + SNAKE_EPS), params["b2"],
            params["g3"], params["be3"]]
    return jnp.stack([v.astype(jnp.float32) for v in cols], axis=1)  # (C,NCOL)


def _affine_from_stats(stats, gamma, beta, length):
    # stats: (N, nt, C, 2) per-tile (sum, sumsq) -> per-(n,c) scale / shift.
    s = jnp.sum(stats, axis=1)                           # (N, C, 2)
    mean = s[..., 0] / length
    var = jnp.maximum(s[..., 1] / length - mean * mean, 0.0)
    scale = gamma[None, :] * lax.rsqrt(var + EPS)
    shift = beta[None, :] - mean * scale
    return jnp.stack([scale, shift], axis=-1).astype(jnp.float32)    # (N, C, 2)


def block_forward(x_ncl, params, *, kernel_size, dilation,
                  matmul_dtype=jnp.float32, force_tile_l=None):
    """forward(x) = x + ln3(conv2(snake2(In2(conv1(snake1(x)))))) , x in NCL.
    matmul_dtype=jnp.bfloat16 recommended on v6e/v7x (weights pre-cast, conv
    input cast once; norm/activation math stays f32)."""
    n, c, length = x_ncl.shape
    c_out = params["w1"].shape[0]
    assert c_out == c, "residual add requires in_channels == out_channels"
    assert kernel_size % 2 == 1, "even kernel_size changes length in PyTorch"

    pad1 = dilation * (kernel_size - 1) // 2
    pad2 = kernel_size // 2

    x_ncl = x_ncl.astype(jnp.float32)
    packed = _pack_params(params)
    cap = _tpu_vmem_capacity_bytes()

    def vmem_limit(working_set):
        return int(min(cap - 12 * 2**20, max(32 * 2**20, 2 * working_set)))

    # ---------------- fused single-slab path ----------------
    def run_fused():
        assert pad1 < length and pad2 < length, "tap offset exceeds length"
        # im2col only when the contraction dim is MXU-friendly and channels
        # are sublane-aligned; otherwise per-tap accumulated matmuls.
        fuse_im2col = (c % 8 == 0) and (c >= 128) and (cap >= 100 * 2**20)
        if fuse_im2col:
            w1 = _fold_weight_im2col(params["w1"], matmul_dtype)
            w2 = _fold_weight_im2col(params["w2"], matmul_dtype)
            w_spec = lambda w: pl.BlockSpec(w.shape, lambda b: (0, 0))
        else:
            w1 = _fold_weight_acc(params["w1"], matmul_dtype)
            w2 = _fold_weight_acc(params["w2"], matmul_dtype)
            w_spec = lambda w: pl.BlockSpec(w.shape, lambda b: (0, 0, 0))

        slab = c * length * 4
        est = ((10 + (kernel_size if fuse_im2col else 0)) * slab
               + 4 * (w1.size + w2.size) * w1.dtype.itemsize + 4 * c * 128)
        cost = pl.CostEstimate(
            flops=4 * n * kernel_size * c * c * length,
            transcendentals=2 * n * c * length,
            bytes_accessed=2 * n * slab + (w1.size + w2.size) * 4)

        kern = functools.partial(
            fused_block_kernel, ksize=kernel_size, dilation=dilation,
            pad1=pad1, pad2=pad2, matmul_dtype=matmul_dtype,
            fuse_im2col=fuse_im2col)

        return pl.pallas_call(
            kern,
            out_shape=jax.ShapeDtypeStruct((n, c, length), jnp.float32),
            grid_spec=pltpu.PrefetchScalarGridSpec(
                num_scalar_prefetch=0, grid=(n,),
                in_specs=[pl.BlockSpec((1, c, length), lambda b: (b, 0, 0)),
                          pl.BlockSpec((c, NCOL), lambda b: (0, 0)),
                          w_spec(w1), w_spec(w2)],
                out_specs=pl.BlockSpec((1, c, length), lambda b: (b, 0, 0))),
            compiler_params=pltpu.CompilerParams(
                dimension_semantics=("parallel",),
                vmem_limit_bytes=vmem_limit(est)),
            cost_estimate=cost,
        )(x_ncl, packed, w1, w2)

    # ---------------- L-tiled three-pass path ----------------
    def run_tiled(tile_l):
        assert length % tile_l == 0 and tile_l % 128 == 0
        assert pad1 < tile_l and pad2 < tile_l, "halo must fit one tile"
        nt = length // tile_l
        w1 = _fold_weight_acc(params["w1"], matmul_dtype)
        w2 = _fold_weight_acc(params["w2"], matmul_dtype)

        # clamped neighbour-tile indices, scalar-prefetched into SMEM
        prev_ids = jnp.maximum(jnp.arange(nt, dtype=jnp.int32) - 1, 0)
        next_ids = jnp.minimum(jnp.arange(nt, dtype=jnp.int32) + 1, nt - 1)

        tile_spec = lambda im: pl.BlockSpec((1, c, tile_l), im)
        i_curr = lambda b, i, pv, nx: (b, 0, i)
        i_prev = lambda b, i, pv, nx: (b, 0, pv[i])
        i_next = lambda b, i, pv, nx: (b, 0, nx[i])
        i_par = lambda b, i, pv, nx: (0, 0)
        i_w = lambda b, i, pv, nx: (0, 0, 0)
        i_aff = lambda b, i, pv, nx: (b, 0, 0)
        i_st = lambda b, i, pv, nx: (b, i, 0, 0)

        tile_bytes = c * tile_l * 4
        est = 16 * tile_bytes + 4 * (w1.size + w2.size) * w1.dtype.itemsize
        cparams = pltpu.CompilerParams(
            dimension_semantics=("parallel", "parallel"),
            vmem_limit_bytes=vmem_limit(est))
        conv_cost = pl.CostEstimate(
            flops=2 * n * kernel_size * c * c * length,
            transcendentals=3 * n * c * length,
            bytes_accessed=5 * n * c * length * 4)

        # ---- pass 1: snake1 + conv1 + per-tile (sum, sumsq) for In2 ----
        y1, st1 = pl.pallas_call(
            functools.partial(pass1_kernel, ksize=kernel_size,
                              dilation=dilation, pad=pad1,
                              matmul_dtype=matmul_dtype),
            out_shape=(jax.ShapeDtypeStruct((n, c, length), jnp.float32),
                       jax.ShapeDtypeStruct((n, nt, c, 2), jnp.float32)),
            grid_spec=pltpu.PrefetchScalarGridSpec(
                num_scalar_prefetch=2, grid=(n, nt),
                in_specs=[tile_spec(i_prev), tile_spec(i_curr),
                          tile_spec(i_next),
                          pl.BlockSpec((c, NCOL), i_par),
                          pl.BlockSpec(w1.shape, i_w)],
                out_specs=[tile_spec(i_curr),
                           pl.BlockSpec((1, 1, c, 2), i_st)]),
            compiler_params=cparams, cost_estimate=conv_cost,
        )(prev_ids, next_ids, x_ncl, x_ncl, x_ncl, packed, w1)

        aff2 = _affine_from_stats(st1, params["g2"].astype(jnp.float32),
                                  params["be2"].astype(jnp.float32), length)

        # ---- pass 2: In2-normalize + snake2 + conv2 + stats for ln3 ----
        y2, st2 = pl.pallas_call(
            functools.partial(pass2_kernel, ksize=kernel_size, pad=pad2,
                              matmul_dtype=matmul_dtype),
            out_shape=(jax.ShapeDtypeStruct((n, c, length), jnp.float32),
                       jax.ShapeDtypeStruct((n, nt, c, 2), jnp.float32)),
            grid_spec=pltpu.PrefetchScalarGridSpec(
                num_scalar_prefetch=2, grid=(n, nt),
                in_specs=[tile_spec(i_prev), tile_spec(i_curr),
                          tile_spec(i_next),
                          pl.BlockSpec((1, c, 2), i_aff),
                          pl.BlockSpec((c, NCOL), i_par),
                          pl.BlockSpec(w2.shape, i_w)],
                out_specs=[tile_spec(i_curr),
                           pl.BlockSpec((1, 1, c, 2), i_st)]),
            compiler_params=cparams, cost_estimate=conv_cost,
        )(prev_ids, next_ids, y1, y1, y1, aff2, packed, w2)

        aff3 = _affine_from_stats(st2, params["g3"].astype(jnp.float32),
                                  params["be3"].astype(jnp.float32), length)

        # ---- pass 3: ln3-normalize + residual add ----
        return pl.pallas_call(
            pass3_kernel,
            out_shape=jax.ShapeDtypeStruct((n, c, length), jnp.float32),
            grid_spec=pltpu.PrefetchScalarGridSpec(
                num_scalar_prefetch=0, grid=(n, nt),
                in_specs=[pl.BlockSpec((1, c, tile_l), lambda b, i: (b, 0, i)),
                          pl.BlockSpec((1, c, tile_l), lambda b, i: (b, 0, i)),
                          pl.BlockSpec((1, c, 2), lambda b, i: (b, 0, 0))],
                out_specs=pl.BlockSpec((1, c, tile_l),
                                       lambda b, i: (b, 0, i))),
            compiler_params=pltpu.CompilerParams(
                dimension_semantics=("parallel", "parallel"),
                vmem_limit_bytes=vmem_limit(8 * tile_bytes)),
            cost_estimate=pl.CostEstimate(
                flops=3 * n * c * length, transcendentals=0,
                bytes_accessed=3 * n * c * length * 4),
        )(x_ncl, y2, aff3)

    if force_tile_l is not None:
        return run_tiled(int(force_tile_l))

    slab = c * length * 4
    est_fused = 12 * slab + 8 * kernel_size * c * c * 4
    if est_fused <= int(0.6 * cap) or length % 128 != 0:
        return run_fused()   # fits resident / ragged L fallback
    best = None
    t = 128
    while t <= min(length, 8192):
        if length % t == 0 and 16 * c * t * 4 <= int(0.5 * cap):
            best = t
        t += 128
    if best is None:
        return run_fused()   # TODO(synk): very-wide-C fallback needs C-tiling
    return run_tiled(best)


# ----------------------------- parameter init ----------------------------------

def orthogonal_init(key, shape):
    rows = shape[0]
    cols = int(np.prod(shape[1:]))
    big, small = max(rows, cols), min(rows, cols)
    a = jax.random.normal(key, (big, small), dtype=jnp.float32)
    q, r = jnp.linalg.qr(a)
    d = jnp.diagonal(r)
    q = q * jnp.where(d == 0, 1.0, jnp.sign(d))[None, :]
    if rows < cols:
        q = q.T
    return q.reshape(shape)


def init_params(key, in_channels, out_channels, kernel_size):
    k1, k2 = jax.random.split(key)
    return {
        "a1": jnp.ones((in_channels,), jnp.float32),                  # Snake 1
        "w1": orthogonal_init(k1, (out_channels, in_channels, kernel_size)),
        "b1": jnp.zeros((out_channels,), jnp.float32),
        "g2": jnp.ones((out_channels,), jnp.float32),                 # In2
        "be2": jnp.zeros((out_channels,), jnp.float32),
        "a2": jnp.ones((out_channels,), jnp.float32),                 # Snake 2
        "w2": orthogonal_init(k2, (out_channels, out_channels, kernel_size)),
        "b2": jnp.zeros((out_channels,), jnp.float32),
        "g3": jnp.full((out_channels,), 0.2, jnp.float32),            # ln3
        "be3": jnp.zeros((out_channels,), jnp.float32),
    }


# ----------------------------- pure-JAX reference ------------------------------

def ref_forward(x, p, *, kernel_size, dilation):
    def snake(h, a):
        a = a[None, :, None]
        return h + jnp.sin(a * h) ** 2 / a

    def inorm(h, g, b):
        m = h.mean(-1, keepdims=True)
        v = ((h - m) ** 2).mean(-1, keepdims=True)
        return (h - m) / jnp.sqrt(v + EPS) * g[None, :, None] + b[None, :, None]

    def conv(h, w, b, d, pad):
        y = lax.conv_general_dilated(h, w, window_strides=(1,),
                                     padding=[(pad, pad)], rhs_dilation=(d,),
                                     dimension_numbers=("NCH", "OIH", "NCH"))
        return y + b[None, :, None]

    h = snake(x, p["a1"])
    h = conv(h, p["w1"], p["b1"], dilation, dilation * (kernel_size - 1) // 2)
    h = inorm(h, p["g2"], p["be2"])
    h = snake(h, p["a2"])
    h = conv(h, p["w2"], p["b2"], 1, kernel_size // 2)
    h = inorm(h, p["g3"], p["be3"])
    return x + h


# ----------------------------- main ---------------------------------------------

if __name__ == "__main__":
    kernel_size, dilation = 3, 2
    key = jax.random.PRNGKey(0)
    k_x, k_p, k_x2, k_p2 = jax.random.split(key, 4)

    # Test 1: small shapes -> fused single-slab path.
    batch, channels, length = 2, 4, 16
    x = jax.random.normal(k_x, (batch, channels, length), dtype=jnp.float32)
    params = init_params(k_p, channels, channels, kernel_size)
    out = jax.block_until_ready(
        block_forward(x, params, kernel_size=kernel_size, dilation=dilation))
    ref = jax.block_until_ready(
        ref_forward(x, params, kernel_size=kernel_size, dilation=dilation))
    err1 = float(jnp.max(jnp.abs(out - ref)))
    assert out.shape == x.shape and err1 < 1e-3, f"fused mismatch {err1}"

    # Test 2: force the L-tiled three-pass path (halo tiles + split norm).
    batch2, channels2, length2 = 2, 8, 256
    x2 = jax.random.normal(k_x2, (batch2, channels2, length2), jnp.float32)
    params2 = init_params(k_p2, channels2, channels2, kernel_size)
    out2 = jax.block_until_ready(
        block_forward(x2, params2, kernel_size=kernel_size, dilation=dilation,
                      force_tile_l=128))
    ref2 = jax.block_until_ready(
        ref_forward(x2, params2, kernel_size=kernel_size, dilation=dilation))
    err2 = float(jnp.max(jnp.abs(out2 - ref2)))
    assert out2.shape == x2.shape and err2 < 1e-3, f"tiled mismatch {err2}"

    print("KERNEL_OK")
</pallas_src>

<mosaic_0001>
module attributes {stable_mosaic.version = 11 : i64} {
  func.func @fused_block_kernel(%arg0: i32, %arg1: memref<1x4x16xf32, #tpu.memory_space<vmem>>, %arg2: memref<4x10xf32, #tpu.memory_space<vmem>>, %arg3: memref<3x4x4xf32, #tpu.memory_space<vmem>>, %arg4: memref<3x4x4xf32, #tpu.memory_space<vmem>>, %arg5: memref<1x4x16xf32, #tpu.memory_space<vmem>>) attributes {dimension_semantics = [#tpu.dimension_semantics<parallel>], iteration_bounds = array<i64: 2>, scalar_prefetch = 0 : i64, scratch_operands = 0 : i64, tpu.core_type = #tpu.core_type<tc>, window_params = [{transform_indices = @transform_0, window_bounds = array<i64: 1, 4, 16>}, {pipeline_mode = #tpu.pipeline_mode<synchronous>, transform_indices = @transform_1, window_bounds = array<i64: 4, 10>}, {pipeline_mode = #tpu.pipeline_mode<synchronous>, transform_indices = @transform_2, window_bounds = array<i64: 3, 4, 4>}, {pipeline_mode = #tpu.pipeline_mode<synchronous>, transform_indices = @transform_3, window_bounds = array<i64: 3, 4, 4>}, {transform_indices = @transform_4, window_bounds = array<i64: 1, 4, 16>}]} {
    %c0 = arith.constant 0 : index
    %c0_0 = arith.constant 0 : index
    %c0_1 = arith.constant 0 : index
    %0 = vector.load %arg1[%c0, %c0_0, %c0_1] : memref<1x4x16xf32, #tpu.memory_space<vmem>>, vector<1x4x16xf32>
    %1 = vector.shape_cast %0 : vector<1x4x16xf32> to vector<4x16xf32>
    %c0_2 = arith.constant 0 : index
    %c0_3 = arith.constant 0 : index
    %2 = vector.load %arg2[%c0_2, %c0_3] : memref<4x10xf32, #tpu.memory_space<vmem>>, vector<4x10xf32>
    %3 = tpu.iota {dimensions = array<i32: 1>} : vector<1x16xi32>
    %4 = vector.extract_strided_slice %2 {offsets = [0, 0], sizes = [4, 1], strides = [1, 1]} : vector<4x10xf32> to vector<4x1xf32>
    %5 = vector.extract_strided_slice %2 {offsets = [0, 1], sizes = [4, 1], strides = [1, 1]} : vector<4x10xf32> to vector<4x1xf32>
    %6 = vector.broadcast %4 : vector<4x1xf32> to vector<4x16xf32>
    %7 = arith.mulf %6, %1 : vector<4x16xf32>
    %8 = math.sin %7 : vector<4x16xf32>
    %9 = arith.mulf %8, %8 : vector<4x16xf32>
    %10 = vector.broadcast %5 : vector<4x1xf32> to vector<4x16xf32>
    %11 = arith.mulf %10, %9 : vector<4x16xf32>
    %12 = arith.addf %1, %11 : vector<4x16xf32>
    %13 = vector.extract_strided_slice %2 {offsets = [0, 2], sizes = [4, 1], strides = [1, 1]} : vector<4x10xf32> to vector<4x1xf32>
    %c2_i32 = arith.constant 2 : i32
    %14 = tpu.dynamic_rotate %12 by %c2_i32 dim 1 : vector<4x16xf32>, i32 -> vector<4x16xf32>
    %c2_i32_4 = arith.constant 2 : i32
    %15 = vector.broadcast %c2_i32_4 : i32 to vector<1x16xi32>
    %16 = arith.cmpi sge, %3, %15 : vector<1x16xi32>
    %cst = arith.constant 0.000000e+00 : f32
    %17 = vector.broadcast %cst : f32 to vector<4x16xf32>
    %18 = vector.shape_cast %16 : vector<1x16xi1> to vector<1x16xi1>
    %19 = vector.broadcast %18 : vector<1x16xi1> to vector<4x16xi1>
    %20 = arith.select %19, %14, %17 : vector<4x16xi1>, vector<4x16xf32>
    %c0_5 = arith.constant 0 : index
    %c0_6 = arith.constant 0 : index
    %c0_7 = arith.constant 0 : index
    %21 = vector.load %arg3[%c0_5, %c0_6, %c0_7] : memref<3x4x4xf32, #tpu.memory_space<vmem>>, vector<1x4x4xf32>
    %22 = vector.shape_cast %21 : vector<1x4x4xf32> to vector<4x4xf32>
    %cst_8 = arith.constant dense<0.000000e+00> : vector<4x16xf32>
    %23 = tpu.matmul %22, %20, %cst_8 {dimension_numbers = #tpu.dot_dimension_numbers<[1], [0], [0], [1], [0, 0, 1, 1], [], []>} : vector<4x4xf32>, vector<4x16xf32>, vector<4x16xf32> -> vector<4x16xf32>
    %c1 = arith.constant 1 : index
    %c0_9 = arith.constant 0 : index
    %c0_10 = arith.constant 0 : index
    %24 = vector.load %arg3[%c1, %c0_9, %c0_10] : memref<3x4x4xf32, #tpu.memory_space<vmem>>, vector<1x4x4xf32>
    %25 = vector.shape_cast %24 : vector<1x4x4xf32> to vector<4x4xf32>
    %cst_11 = arith.constant dense<0.000000e+00> : vector<4x16xf32>
    %26 = tpu.matmul %25, %12, %cst_11 {dimension_numbers = #tpu.dot_dimension_numbers<[1], [0], [0], [1], [0, 0, 1, 1], [], []>} : vector<4x4xf32>, vector<4x16xf32>, vector<4x16xf32> -> vector<4x16xf32>
    %27 = arith.addf %23, %26 : vector<4x16xf32>
    %c14_i32 = arith.constant 14 : i32
    %28 = tpu.dynamic_rotate %12 by %c14_i32 dim 1 : vector<4x16xf32>, i32 -> vector<4x16xf32>
    %c14_i32_12 = arith.constant 14 : i32
    %29 = vector.broadcast %c14_i32_12 : i32 to vector<1x16xi32>
    %30 = arith.cmpi slt, %3, %29 : vector<1x16xi32>
    %cst_13 = arith.constant 0.000000e+00 : f32
    %31 = vector.broadcast %cst_13 : f32 to vector<4x16xf32>
    %32 = vector.shape_cast %30 : vector<1x16xi1> to vector<1x16xi1>
    %33 = vector.broadcast %32 : vector<1x16xi1> to vector<4x16xi1>
    %34 = arith.select %33, %28, %31 : vector<4x16xi1>, vector<4x16xf32>
    %c2 = arith.constant 2 : index
    %c0_14 = arith.constant 0 : index
    %c0_15 = arith.constant 0 : index
    %35 = vector.load %arg3[%c2, %c0_14, %c0_15] : memref<3x4x4xf32, #tpu.memory_space<vmem>>, vector<1x4x4xf32>
    %36 = vector.shape_cast %35 : vector<1x4x4xf32> to vector<4x4xf32>
    %cst_16 = arith.constant dense<0.000000e+00> : vector<4x16xf32>
    %37 = tpu.matmul %36, %34, %cst_16 {dimension_numbers = #tpu.dot_dimension_numbers<[1], [0], [0], [1], [0, 0, 1, 1], [], []>} : vector<4x4xf32>, vector<4x16xf32>, vector<4x16xf32> -> vector<4x16xf32>
    %38 = arith.addf %27, %37 : vector<4x16xf32>
    %39 = vector.broadcast %13 : vector<4x1xf32> to vector<4x16xf32>
    %40 = arith.addf %38, %39 : vector<4x16xf32>
    %41 = vector.extract_strided_slice %2 {offsets = [0, 3], sizes = [4, 1], strides = [1, 1]} : vector<4x10xf32> to vector<4x1xf32>
    %42 = vector.extract_strided_slice %2 {offsets = [0, 4], sizes = [4, 1], strides = [1, 1]} : vector<4x10xf32> to vector<4x1xf32>
    %cst_17 = arith.constant dense<0.000000e+00> : vector<4xf32>
    %43 = vector.multi_reduction <add>, %40, %cst_17 [1] : vector<4x16xf32> to vector<4xf32>
    %44 = vector.shape_cast %43 : vector<4xf32> to vector<4x1xf32>
    %45 = arith.mulf %40, %40 : vector<4x16xf32>
    %cst_18 = arith.constant dense<0.000000e+00> : vector<4xf32>
    %46 = vector.multi_reduction <add>, %45, %cst_18 [1] : vector<4x16xf32> to vector<4xf32>
    %47 = vector.shape_cast %46 : vector<4xf32> to vector<4x1xf32>
    %cst_19 = arith.constant 6.250000e-02 : f32
    %48 = vector.broadcast %cst_19 : f32 to vector<4x1xf32>
    %49 = arith.mulf %44, %48 : vector<4x1xf32>
    %cst_20 = arith.constant 6.250000e-02 : f32
    %50 = vector.broadcast %cst_20 : f32 to vector<4x1xf32>
    %51 = arith.mulf %47, %50 : vector<4x1xf32>
    %52 = arith.mulf %49, %49 : vector<4x1xf32>
    %53 = arith.subf %51, %52 : vector<4x1xf32>
    %cst_21 = arith.constant 0.000000e+00 : f32
    %54 = vector.broadcast %cst_21 : f32 to vector<4x1xf32>
    %55 = arith.maximumf %53, %54 : vector<4x1xf32>
    %cst_22 = arith.constant 9.99999974E-6 : f32
    %56 = vector.broadcast %cst_22 : f32 to vector<4x1xf32>
    %57 = arith.addf %55, %56 : vector<4x1xf32>
    %58 = math.rsqrt %57 : vector<4x1xf32>
    %59 = arith.mulf %58, %41 : vector<4x1xf32>
    %60 = vector.broadcast %49 : vector<4x1xf32> to vector<4x16xf32>
    %61 = arith.subf %40, %60 : vector<4x16xf32>
    %62 = vector.broadcast %59 : vector<4x1xf32> to vector<4x16xf32>
    %63 = arith.mulf %61, %62 : vector<4x16xf32>
    %64 = vector.broadcast %42 : vector<4x1xf32> to vector<4x16xf32>
    %65 = arith.addf %63, %64 : vector<4x16xf32>
    %66 = vector.extract_strided_slice %2 {offsets = [0, 5], sizes = [4, 1], strides = [1, 1]} : vector<4x10xf32> to vector<4x1xf32>
    %67 = vector.extract_strided_slice %2 {offsets = [0, 6], sizes = [4, 1], strides = [1, 1]} : vector<4x10xf32> to vector<4x1xf32>
    %68 = vector.broadcast %66 : vector<4x1xf32> to vector<4x16xf32>
    %69 = arith.mulf %68, %65 : vector<4x16xf32>
    %70 = math.sin %69 : vector<4x16xf32>
    %71 = arith.mulf %70, %70 : vector<4x16xf32>
    %72 = vector.broadcast %67 : vector<4x1xf32> to vector<4x16xf32>
    %73 = arith.mulf %72, %71 : vector<4x16xf32>
    %74 = arith.addf %65, %73 : vector<4x16xf32>
    %75 = vector.extract_strided_slice %2 {offsets = [0, 7], sizes = [4, 1], strides = [1, 1]} : vector<4x10xf32> to vector<4x1xf32>
    %c1_i32 = arith.constant 1 : i32
    %76 = tpu.dynamic_rotate %74 by %c1_i32 dim 1 : vector<4x16xf32>, i32 -> vector<4x16xf32>
    %c1_i32_23 = arith.constant 1 : i32
    %77 = vector.broadcast %c1_i32_23 : i32 to vector<1x16xi32>
    %78 = arith.cmpi sge, %3, %77 : vector<1x16xi32>
    %cst_24 = arith.constant 0.000000e+00 : f32
    %79 = vector.broadcast %cst_24 : f32 to vector<4x16xf32>
    %80 = vector.shape_cast %78 : vector<1x16xi1> to vector<1x16xi1>
    %81 = vector.broadcast %80 : vector<1x16xi1> to vector<4x16xi1>
    %82 = arith.select %81, %76, %79 : vector<4x16xi1>, vector<4x16xf32>
    %c0_25 = arith.constant 0 : index
    %c0_26 = arith.constant 0 : index
    %c0_27 = arith.constant 0 : index
    %83 = vector.load %arg4[%c0_25, %c0_26, %c0_27] : memref<3x4x4xf32, #tpu.memory_space<vmem>>, vector<1x4x4xf32>
    %84 = vector.shape_cast %83 : vector<1x4x4xf32> to vector<4x4xf32>
    %cst_28 = arith.constant dense<0.000000e+00> : vector<4x16xf32>
    %85 = tpu.matmul %84, %82, %cst_28 {dimension_numbers = #tpu.dot_dimension_numbers<[1], [0], [0], [1], [0, 0, 1, 1], [], []>} : vector<4x4xf32>, vector<4x16xf32>, vector<4x16xf32> -> vector<4x16xf32>
    %c1_29 = arith.constant 1 : index
    %c0_30 = arith.constant 0 : index
    %c0_31 = arith.constant 0 : index
    %86 = vector.load %arg4[%c1_29, %c0_30, %c0_31] : memref<3x4x4xf32, #tpu.memory_space<vmem>>, vector<1x4x4xf32>
    %87 = vector.shape_cast %86 : vector<1x4x4xf32> to vector<4x4xf32>
    %cst_32 = arith.constant dense<0.000000e+00> : vector<4x16xf32>
    %88 = tpu.matmul %87, %74, %cst_32 {dimension_numbers = #tpu.dot_dimension_numbers<[1], [0], [0], [1], [0, 0, 1, 1], [], []>} : vector<4x4xf32>, vector<4x16xf32>, vector<4x16xf32> -> vector<4x16xf32>
    %89 = arith.addf %85, %88 : vector<4x16xf32>
    %c15_i32 = arith.constant 15 : i32
    %90 = tpu.dynamic_rotate %74 by %c15_i32 dim 1 : vector<4x16xf32>, i32 -> vector<4x16xf32>
    %c15_i32_33 = arith.constant 15 : i32
    %91 = vector.broadcast %c15_i32_33 : i32 to vector<1x16xi32>
    %92 = arith.cmpi slt, %3, %91 : vector<1x16xi32>
    %cst_34 = arith.constant 0.000000e+00 : f32
    %93 = vector.broadcast %cst_34 : f32 to vector<4x16xf32>
    %94 = vector.shape_cast %92 : vector<1x16xi1> to vector<1x16xi1>
    %95 = vector.broadcast %94 : vector<1x16xi1> to vector<4x16xi1>
    %96 = arith.select %95, %90, %93 : vector<4x16xi1>, vector<4x16xf32>
    %c2_35 = arith.constant 2 : index
    %c0_36 = arith.constant 0 : index
    %c0_37 = arith.constant 0 : index
    %97 = vector.load %arg4[%c2_35, %c0_36, %c0_37] : memref<3x4x4xf32, #tpu.memory_space<vmem>>, vector<1x4x4xf32>
    %98 = vector.shape_cast %97 : vector<1x4x4xf32> to vector<4x4xf32>
    %cst_38 = arith.constant dense<0.000000e+00> : vector<4x16xf32>
    %99 = tpu.matmul %98, %96, %cst_38 {dimension_numbers = #tpu.dot_dimension_numbers<[1], [0], [0], [1], [0, 0, 1, 1], [], []>} : vector<4x4xf32>, vector<4x16xf32>, vector<4x16xf32> -> vector<4x16xf32>
    %100 = arith.addf %89, %99 : vector<4x16xf32>
    %101 = vector.broadcast %75 : vector<4x1xf32> to vector<4x16xf32>
    %102 = arith.addf %100, %101 : vector<4x16xf32>
    %103 = vector.extract_strided_slice %2 {offsets = [0, 8], sizes = [4, 1], strides = [1, 1]} : vector<4x10xf32> to vector<4x1xf32>
    %104 = vector.extract_strided_slice %2 {offsets = [0, 9], sizes = [4, 1], strides = [1, 1]} : vector<4x10xf32> to vector<4x1xf32>
    %cst_39 = arith.constant dense<0.000000e+00> : vector<4xf32>
    %105 = vector.multi_reduction <add>, %102, %cst_39 [1] : vector<4x16xf32> to vector<4xf32>
    %106 = vector.shape_cast %105 : vector<4xf32> to vector<4x1xf32>
    %107 = arith.mulf %102, %102 : vector<4x16xf32>
    %cst_40 = arith.constant dense<0.000000e+00> : vector<4xf32>
    %108 = vector.multi_reduction <add>, %107, %cst_40 [1] : vector<4x16xf32> to vector<4xf32>
    %109 = vector.shape_cast %108 : vector<4xf32> to vector<4x1xf32>
    %cst_41 = arith.constant 6.250000e-02 : f32
    %110 = vector.broadcast %cst_41 : f32 to vector<4x1xf32>
    %111 = arith.mulf %106, %110 : vector<4x1xf32>
    %cst_42 = arith.constant 6.250000e-02 : f32
    %112 = vector.broadcast %cst_42 : f32 to vector<4x1xf32>
    %113 = arith.mulf %109, %112 : vector<4x1xf32>
    %114 = arith.mulf %111, %111 : vector<4x1xf32>
    %115 = arith.subf %113, %114 : vector<4x1xf32>
    %cst_43 = arith.constant 0.000000e+00 : f32
    %116 = vector.broadcast %cst_43 : f32 to vector<4x1xf32>
    %117 = arith.maximumf %115, %116 : vector<4x1xf32>
    %cst_44 = arith.constant 9.99999974E-6 : f32
    %118 = vector.broadcast %cst_44 : f32 to vector<4x1xf32>
    %119 = arith.addf %117, %118 : vector<4x1xf32>
    %120 = math.rsqrt %119 : vector<4x1xf32>
    %121 = arith.mulf %120, %103 : vector<4x1xf32>
    %122 = vector.broadcast %111 : vector<4x1xf32> to vector<4x16xf32>
    %123 = arith.subf %102, %122 : vector<4x16xf32>
    %124 = vector.broadcast %121 : vector<4x1xf32> to vector<4x16xf32>
    %125 = arith.mulf %123, %124 : vector<4x16xf32>
    %126 = vector.broadcast %104 : vector<4x1xf32> to vector<4x16xf32>
    %127 = arith.addf %125, %126 : vector<4x16xf32>
    %128 = arith.addf %1, %127 : vector<4x16xf32>
    %c0_45 = arith.constant 0 : index
    %c0_46 = arith.constant 0 : index
    %c0_47 = arith.constant 0 : index
    %129 = vector.load %arg5[%c0_45, %c0_46, %c0_47] : memref<1x4x16xf32, #tpu.memory_space<vmem>>, vector<1x4x16xf32>
    %130 = vector.shape_cast %129 : vector<1x4x16xf32> to vector<4x16xf32>
    %131 = vector.shape_cast %128 : vector<4x16xf32> to vector<1x4x16xf32>
    tpu.vector_store %arg5[%c0_45, %c0_46, %c0_47], %131 {strides = array<i32>} : memref<1x4x16xf32, #tpu.memory_space<vmem>>, vector<1x4x16xf32>,
    return
  }
  func.func @transform_0(%arg0: i32) -> (i32, i32, i32) {
    %c0_i32 = arith.constant 0 : i32
    %c0_i32_0 = arith.constant 0 : i32
    %c0_i32_1 = arith.constant 0 : i32
    return %arg0, %c0_i32, %c0_i32_0 : i32, i32, i32
  }
  func.func @transform_1(%arg0: i32) -> (i32, i32) {
    %c0_i32 = arith.constant 0 : i32
    %c0_i32_0 = arith.constant 0 : i32
    %c0_i32_1 = arith.constant 0 : i32
    return %c0_i32, %c0_i32_0 : i32, i32
  }
  func.func @transform_2(%arg0: i32) -> (i32, i32, i32) {
    %c0_i32 = arith.constant 0 : i32
    %c0_i32_0 = arith.constant 0 : i32
    %c0_i32_1 = arith.constant 0 : i32
    %c0_i32_2 = arith.constant 0 : i32
    return %c0_i32, %c0_i32_0, %c0_i32_1 : i32, i32, i32
  }
  func.func @transform_3(%arg0: i32) -> (i32, i32, i32) {
    %c0_i32 = arith.constant 0 : i32
    %c0_i32_0 = arith.constant 0 : i32
    %c0_i32_1 = arith.constant 0 : i32
    %c0_i32_2 = arith.constant 0 : i32
    return %c0_i32, %c0_i32_0, %c0_i32_1 : i32, i32, i32
  }
  func.func @transform_4(%arg0: i32) -> (i32, i32, i32) {
    %c0_i32 = arith.constant 0 : i32
    %c0_i32_0 = arith.constant 0 : i32
    %c0_i32_1 = arith.constant 0 : i32
    return %arg0, %c0_i32, %c0_i32_0 : i32, i32, i32
  }
}

</mosaic_0001>

<llo_original>
// kernel: tpu_custom_call.1
$region0: #{tpu_custom_call.1}
  #allocation0 [shape = 'u32[]', space=smem, size = 0x4, offset = 0x4, fixed_abs, tag = 'smem constant byte address 0x4 - core index']
  #allocation1 [shape = 'u32[144,128]{1,0:T(1,128)}', space=vmem, size = 0x12000, scoped, tag = 'internal scratch']
  %s0 = inlined_call_operand.hbm [shape: f32[2,4,16], index: 0, kind: input, shape index: {}]
  %s1 = inlined_call_operand.hbm [shape: f32[4,10], index: 1, kind: input, shape index: {}]
  %s2 = inlined_call_operand.hbm [shape: f32[3,4,4], index: 2, kind: input, shape index: {}]
  %s3 = inlined_call_operand.hbm [shape: f32[3,4,4], index: 3, kind: input, shape index: {}]
  %s4 = inlined_call_operand.hbm [shape: f32[2,4,16], index: 4, kind: output, shape index: {}]
  %s5 = sld [smem:[#allocation0]]
  $region65: #{tpu_custom_call.1} parent=0
    _
  %s7 = ssub.s32 1, %s5
  %s8 = scalar_select 0, %s7, %s5
  $region1: #{tpu_custom_call.1} parent=0
    #allocation2 [shape = 'u8[4096]{0}', space=vmem, size = 0x1000, scoped, tag = 'input window, operand 0']
    #allocation3 [shape = 's32[2]{0}', space=sflag, size = 0x8, scoped, tag = 'scoped memory for tpu_custom_call.1']
    #allocation4 [shape = 's32[2]{0}', space=sflag, size = 0x8, scoped, tag = 'scoped memory for tpu_custom_call.1']
    #allocation5 [shape = 'u8[2048]{0}', space=vmem, size = 0x800, scoped, tag = 'input window, operand 1, single buffered']
    #allocation6 [shape = 's32[1]{0}', space=sflag, size = 0x4, scoped, tag = 'scoped memory for tpu_custom_call.1']
    #allocation7 [shape = 'u8[6144]{0}', space=vmem, size = 0x1800, scoped, tag = 'input window, operand 2, single buffered']
    #allocation8 [shape = 'u8[6144]{0}', space=vmem, size = 0x1800, scoped, tag = 'input window, operand 3, single buffered']
    #allocation9 [shape = 's32[1]{0}', space=sflag, size = 0x4, scoped, tag = 'scoped memory for tpu_custom_call.1']
    #allocation10 [shape = 'u8[4096]{0}', space=vmem, size = 0x1000, scoped, tag = 'output window, operand 0']
    %9 = vsyncpa [#allocation3], 0
    %s10 = scalar_lea.sflag [#allocation3], 1
    %11 = vsyncpa %s10, 0
    %12 = vsyncpa [#allocation6], 0
    %13 = vsyncpa [#allocation9], 0
    %14 = vsyncpa [#allocation4], 0
    %s15 = scalar_lea.sflag [#allocation4], 1
    %16 = vsyncpa %s15, 0
    loop: start=0, step=1, limit=4
    $region2: #{tpu_custom_call.1} parent=1 // loop_pre_header
      _
    $region3: #{tpu_custom_call.1} parent=1 // loop_header
      %s18 = sphi 0, %s22
      %p19 = scmp.ge.s32.totalorder %s18, 4
      %s28 = sphi 0, %s30
      %s31 = sphi 0, %s28
      %s32 = sphi 0, %s31
      %s48 = sphi 0, %s32
      %s52 = sphi 0, %s52
      %s54 = sphi 0, %s52
      %s55 = sphi 0, %s54
      %s69 = sphi 0, %s55
      %s73 = sphi 0, %s73
      %s75 = sphi 0, %s73
      %s76 = sphi 0, %s75
      %s90 = sphi 0, %s76
      %s94 = sphi 0, %s94
      %s96 = sphi 0, %s94
      %s97 = sphi 0, %s96
      %s111 = sphi 0, %s97
      %s117 = sphi 0, %s119
      %s120 = sphi 0, %s117
      %s121 = sphi 0, %s120
      %s137 = sphi 0, %s121
    $region4: #{tpu_custom_call.1} parent=1 // loop_header_branch
      %21 = sbr.rel (%p19) target = $region8
    $region5: #{tpu_custom_call.1} parent=1 // loop_body
      %s23 = ssub.s32 %s18, 1
      %s24 = ssub.s32 %s18, 2
      %s25 = sadd.s32 %s18, 1
      %s26 = ssub.s32 %s18, %s25
      %p27 = scmp.eq.s32.totalorder %s26, 0
      %s29 = sadd.s32 %s28, 1
      %s30 = scalar_select %p27, %s28, %s29
      %p33 = pneg %p27
      %p34 = scmp.eq.s32.totalorder %s18, 1
      %p35 = por %p33, %p34
      %p36 = scmp.ne.s32.totalorder %s28, %s31
      %p37 = scmp.eq.s32.totalorder %s18, 0
      %p38 = por %p36, %p37
      %p39 = scmp.ne.s32.totalorder %s28, %s31
      %p40 = scmp.eq.s32.totalorder %s23, 1
      %p41 = por %p39, %p40
      %p42 = scmp.ne.s32.totalorder %s31, %s32
      %p43 = scmp.eq.s32.totalorder %s23, 0
      %p44 = por %p42, %p43
      %p45 = scmp.ne.s32.totalorder %s31, %s32
      %p46 = scmp.eq.s32.totalorder %s24, 1
      %p47 = por %p45, %p46
      %p49 = scmp.ne.s32.totalorder %s32, %s48
      %p50 = scmp.eq.s32.totalorder %s24, 0
      %p51 = por %p49, %p50
      %s53 = sadd.s32 %s52, 1
      %p56 = scmp.eq.s32.totalorder %s18, 1
      %p57 = scmp.ne.s32.totalorder %s52, %s54
      %p58 = scmp.eq.s32.totalorder %s18, 0
      %p59 = por %p57, %p58
      %p60 = scmp.ne.s32.totalorder %s52, %s54
      %p61 = scmp.eq.s32.totalorder %s23, 1
      %p62 = por %p60, %p61
      %p63 = scmp.ne.s32.totalorder %s54, %s55
      %p64 = scmp.eq.s32.totalorder %s23, 0
      %p65 = por %p63, %p64
      %p66 = scmp.ne.s32.totalorder %s54, %s55
      %p67 = scmp.eq.s32.totalorder %s24, 1
      %p68 = por %p66, %p67
      %p70 = scmp.ne.s32.totalorder %s55, %s69
      %p71 = scmp.eq.s32.totalorder %s24, 0
      %p72 = por %p70, %p71
      %s74 = sadd.s32 %s73, 1
      %p77 = scmp.eq.s32.totalorder %s18, 1
      %p78 = scmp.ne.s32.totalorder %s73, %s75
      %p79 = scmp.eq.s32.totalorder %s18, 0
      %p80 = por %p78, %p79
      %p81 = scmp.ne.s32.totalorder %s73, %s75
      %p82 = scmp.eq.s32.totalorder %s23, 1
      %p83 = por %p81, %p82
      %p84 = scmp.ne.s32.totalorder %s75, %s76
      %p85 = scmp.eq.s32.totalorder %s23, 0
      %p86 = por %p84, %p85
      %p87 = scmp.ne.s32.totalorder %s75, %s76
      %p88 = scmp.eq.s32.totalorder %s24, 1
      %p89 = por %p87, %p88
      %p91 = scmp.ne.s32.totalorder %s76, %s90
      %p92 = scmp.eq.s32.totalorder %s24, 0
      %p93 = por %p91, %p92
      %s95 = sadd.s32 %s94, 1
      %p98 = scmp.eq.s32.totalorder %s18, 1
      %p99 = scmp.ne.s32.totalorder %s94, %s96
      %p100 = scmp.eq.s32.totalorder %s18, 0
      %p101 = por %p99, %p100
      %p102 = scmp.ne.s32.totalorder %s94, %s96
      %p103 = scmp.eq.s32.totalorder %s23, 1
      %p104 = por %p102, %p103
      %p105 = scmp.ne.s32.totalorder %s96, %s97
      %p106 = scmp.eq.s32.totalorder %s23, 0
      %p107 = por %p105, %p106
      %p108 = scmp.ne.s32.totalorder %s96, %s97
      %p109 = scmp.eq.s32.totalorder %s24, 1
      %p110 = por %p108, %p109
      %p112 = scmp.ne.s32.totalorder %s97, %s111
      %p113 = scmp.eq.s32.totalorder %s24, 0
      %p114 = por %p112, %p113
      %s115 = ssub.s32 %s18, %s25
      %p116 = scmp.eq.s32.totalorder %s115, 0
      %s118 = sadd.s32 %s117, 1
      %s119 = scalar_select %p116, %s117, %s118
      %p122 = pneg %p116
      %p123 = scmp.eq.s32.totalorder %s18, 1
      %p124 = por %p122, %p123
      %p125 = scmp.ne.s32.totalorder %s117, %s120
      %p126 = scmp.eq.s32.totalorder %s18, 0
      %p127 = por %p125, %p126
      %p128 = scmp.ne.s32.totalorder %s117, %s120
      %p129 = scmp.eq.s32.totalorder %s23, 1
      %p130 = por %p128, %p129
      %p131 = scmp.ne.s32.totalorder %s120, %s121
      %p132 = scmp.eq.s32.totalorder %s23, 0
      %p133 = por %p131, %p132
      %p134 = scmp.ne.s32.totalorder %s120, %s121
      %p135 = scmp.eq.s32.totalorder %s24, 1
      %p136 = por %p134, %p135
      %p138 = scmp.ne.s32.totalorder %s121, %s137
      %p139 = scmp.eq.s32.totalorder %s24, 0
      %p140 = por %p138, %p139
      %p141 = scmp.le.s32.totalorder 1, %s18
      %p142 = scmp.lt.s32.totalorder %s18, 3
      %p143 = pnand %p141, %p142
      %p144 = pneg %p143
      // Predicated region
      $region9: #{tpu_custom_call.1} parent=5 // pred_check
        _
      $region10: #{tpu_custom_call.1} parent=5 // pred_check_branch
        %146 = sbr.rel (%p143) target = $region12
      $region11: #{tpu_custom_call.1} parent=5 // pred_region
        %s147 = ssub.s32 %s18, 1
        // Predicated region
        $region13: #{tpu_custom_call.1} parent=11 // pred_check
          %p148 = pneg %p65
        $region14: #{tpu_custom_call.1} parent=11 // pred_check_branch
          %150 = sbr.rel (%p148) target = $region16
        $region15: #{tpu_custom_call.1} parent=11 // pred_region
          %s152 = ssub.s32 64, 64
          %153 = vsyncadd [#allocation6], %s152
          %s155 = sshll.u32 [#allocation5], 4
          %s156 = int_to_ptr.vmem [resolvable:$true] %s155
          %158 = dma.hbm_to_vmem [thread:$0]  %s1, 64, %s156, [#allocation6]
        $region16: #{tpu_custom_call.1} parent=11 // pred_fallthru
          _
        // Predicated region
        $region17: #{tpu_custom_call.1} parent=11 // pred_check
          %p159 = pneg %p86
        $region18: #{tpu_custom_call.1} parent=11 // pred_check_branch
          %161 = sbr.rel (%p159) target = $region20
        $region19: #{tpu_custom_call.1} parent=11 // pred_region
          %s163 = ssub.s32 192, 192
          %164 = vsyncadd [#allocation6], %s163
          %s165 = sshll.u32 [#allocation7], 4
          %s166 = int_to_ptr.vmem [resolvable:$true] %s165
          %171 = dma.hbm_to_vmem [thread:$0]  %s2, 192, %s166, [#allocation6], 64, 64, 4
        $region20: #{tpu_custom_call.1} parent=11 // pred_fallthru
          _
        // Predicated region
        $region21: #{tpu_custom_call.1} parent=11 // pred_check
          %p172 = pneg %p107
        $region22: #{tpu_custom_call.1} parent=11 // pred_check_branch
          %174 = sbr.rel (%p172) target = $region24
        $region23: #{tpu_custom_call.1} parent=11 // pred_region
          %s176 = ssub.s32 192, 192
          %177 = vsyncadd [#allocation9], %s176
          %s178 = sshll.u32 [#allocation8], 4
          %s179 = int_to_ptr.vmem [resolvable:$true] %s178
          %184 = dma.hbm_to_vmem [thread:$0]  %s3, 192, %s179, [#allocation9], 64, 64, 4
        $region24: #{tpu_custom_call.1} parent=11 // pred_fallthru
          _
      $region12: #{tpu_custom_call.1} parent=5 // pred_fallthru
        _
      %p185 = scmp.lt.s32.totalorder %s18, 2
      // Predicated region
      $region25: #{tpu_custom_call.1} parent=5 // pred_check
        %p186 = pneg %p185
      $region26: #{tpu_custom_call.1} parent=5 // pred_check_branch
        %188 = sbr.rel (%p186) target = $region28
      $region27: #{tpu_custom_call.1} parent=5 // pred_region
        // Predicated region
        $region29: #{tpu_custom_call.1} parent=27 // pred_check
          %p189 = pneg %p38
        $region30: #{tpu_custom_call.1} parent=27 // pred_check_branch
          %191 = sbr.rel (%p189) target = $region32
        $region31: #{tpu_custom_call.1} parent=27 // pred_region
          %s192 = sand.u32 %s28, 1
          %s193 = scalar_lea.sflag [#allocation3], %s192
          %s194 = sand.u32 %s28, 1
          %s195 = smul.addr %s194, 4
          %s196 = scalar_lea.vmem [#allocation2], %s195
          %s198 = ssub.s32 64, 64
          %199 = vsyncadd %s193, %s198
          %s200 = smul.addr %s18, 64
          %s201 = scalar_lea.hbm %s0, %s200
          %s203 = sshll.u32 %s196, 4
          %s204 = int_to_ptr.vmem [resolvable:$true] %s203
          %206 = dma.hbm_to_vmem [thread:$0]  %s201, 64, %s204, %s193
        $region32: #{tpu_custom_call.1} parent=27 // pred_fallthru
          _
      $region28: #{tpu_custom_call.1} parent=5 // pred_fallthru
        _
      %p207 = scmp.le.s32.totalorder 1, %s18
      %p208 = scmp.lt.s32.totalorder %s18, 3
      %p209 = pnand %p207, %p208
      %p210 = pneg %p209
      // Predicated region
      $region33: #{tpu_custom_call.1} parent=5 // pred_check
        _
      $region34: #{tpu_custom_call.1} parent=5 // pred_check_branch
        %212 = sbr.rel (%p209) target = $region36
      $region35: #{tpu_custom_call.1} parent=5 // pred_region
        %s213 = ssub.s32 %s18, 1
        %s214 = sand.u32 %s31, 1
        %s215 = scalar_lea.sflag [#allocation3], %s214
        %s216 = sand.u32 %s31, 1
        %s217 = smul.addr %s216, 4
        %s218 = scalar_lea.vmem [#allocation2], %s217
        // Predicated region
        $region37: #{tpu_custom_call.1} parent=35 // pred_check
          %p219 = pneg %p44
        $region38: #{tpu_custom_call.1} parent=35 // pred_check_branch
          %221 = sbr.rel (%p219) target = $region40
        $region39: #{tpu_custom_call.1} parent=35 // pred_region
          %222 = dma.done %s215, 64
        $region40: #{tpu_custom_call.1} parent=35 // pred_fallthru
          _
        // Predicated region
        $region41: #{tpu_custom_call.1} parent=35 // pred_check
          %p223 = pneg %p65
        $region42: #{tpu_custom_call.1} parent=35 // pred_check_branch
          %225 = sbr.rel (%p223) target = $region44
        $region43: #{tpu_custom_call.1} parent=35 // pred_region
          %226 = dma.done [#allocation6], 64
        $region44: #{tpu_custom_call.1} parent=35 // pred_fallthru
          _
        // Predicated region
        $region45: #{tpu_custom_call.1} parent=35 // pred_check
          %p227 = pneg %p86
        $region46: #{tpu_custom_call.1} parent=35 // pred_check_branch
          %229 = sbr.rel (%p227) target = $region48
        $region47: #{tpu_custom_call.1} parent=35 // pred_region
          %230 = dma.done [#allocation6], 192
        $region48: #{tpu_custom_call.1} parent=35 // pred_fallthru
          _
        // Predicated region
        $region49: #{tpu_custom_call.1} parent=35 // pred_check
          %p231 = pneg %p107
        $region50: #{tpu_custom_call.1} parent=35 // pred_check_branch
          %233 = sbr.rel (%p231) target = $region52
        $region51: #{tpu_custom_call.1} parent=35 // pred_region
          %234 = dma.done [#allocation9], 192
        $region52: #{tpu_custom_call.1} parent=35 // pred_fallthru
          _
        %s235 = sand.u32 %s31, 1
        %s236 = scalar_lea.sflag [#allocation3], %s235
        %s237 = sand.u32 %s31, 1
        %s238 = smul.addr %s237, 4
        %s239 = scalar_lea.vmem [#allocation2], %s238
        %p240 = pneg %p44
        %p241 = pneg %p41
        %p242 = pneg %p65
        %p243 = pneg %p62
        %p244 = pneg %p86
        %p245 = pneg %p83
        %p246 = pneg %p107
        %p247 = pneg %p104
        %p248 = pneg %p133
        %p249 = pneg %p130
        %s250 = sand.u32 %s120, 1
        %s251 = scalar_lea.sflag [#allocation4], %s250
        %s252 = sand.u32 %s120, 1
        %s253 = smul.addr %s252, 4
        %s254 = scalar_lea.vmem [#allocation10], %s253
        %v255 = vld [vmem:[%s218] sm:$0xf]
        %v256 = vld [vmem:[#allocation5] sm:$0xf]
        %v257 = vlaneseq
        %v258 = vand.u32 %v257, 127
        %260 = vset.pattern.permute.xlu0 0
        %261 = vperm.xlu0 %260, %v256
        %v262 = vpop.permute.xlu0 %261
        %v264 = vmul.f32 %v262, %v255
        %v265 = vand.u32 2147483647, %v264
        %vm266 = vcmp.le.f32.partialorder %v265, 0.7853982
        %vm267 = vcmp.lt.s32.totalorder %v264, 0
        %v268 = vand.u32 %v264, 2139095040
        %v269 = vshrl.u32 %v268, 23
        %v270 = vsub.s32 %v269, 127
        %v271 = vand.u32 2147483647, %v264
        %v272 = vand.u32 %v271, 8388607
        %v273 = vor.u32 %v272, 8388608
        %v274 = vsub.s32 0, %v273
        %v275 = vadd.s32 %v270, 1
        %vm276 = vcmp.gt.s32.totalorder %v275, 0
        %v277 = vsel %vm276, %v275, 0
        %v278 = vshrl.u32 %v277, 5
        %v279 = vand.u32 %v277, 31
        %v280 = vsub.s32 32, %v279
        %v281 = vshrl.u32 683565275, %v280
        %v282 = vshll.u32 683565275, %v279
        %v283 = vshrl.u32 2475754826, %v280
        %v284 = vor.u32 %v282, %v283
        %v285 = vshll.u32 2475754826, %v279
        %v286 = vshrl.u32 2131351028, %v280
        %v287 = vor.u32 %v285, %v286
        %v288 = vshll.u32 2131351028, %v279
        %v289 = vshrl.u32 2102212464, %v280
        %v290 = vor.u32 %v288, %v289
        %v291 = vshll.u32 2102212464, %v279
        %v292 = vshrl.u32 920167782, %v280
        %v293 = vor.u32 %v291, %v292
        %v294 = vshll.u32 920167782, %v279
        %v295 = vshrl.u32 1326507024, %v280
        %v296 = vor.u32 %v294, %v295
        %vm297 = vcmp.lt.s32.totalorder %v278, 1
        %vm298 = vcmp.lt.s32.totalorder %v278, 2
        %vm299 = vcmp.lt.s32.totalorder %v278, 3
        %vm300 = vcmp.lt.s32.totalorder %v278, 4
        %v301 = vsel %vm297, %v281, %v284
        %v302 = vsel %vm300, %v290, 2102212464
        %v303 = vsel %vm299, %v287, %v302
        %v304 = vsel %vm298, %v301, %v303
        %v305 = vsel %vm297, %v284, %v287
        %v306 = vsel %vm300, %v293, 920167782
        %v307 = vsel %vm299, %v290, %v306
        %v308 = vsel %vm298, %v305, %v307
        %v309 = vsel %vm297, %v287, %v290
        %v310 = vsel %vm300, %v296, 1326507024
        %v311 = vsel %vm299, %v293, %v310
        %v312 = vsel %vm298, %v309, %v311
        %v313 = vshll.u32 %v273, 8
        %v314 = vmul.u32.u64.compose %v313, %v312
        %v315 = vextract.low.u32 %v314
        %v316 = vextract.high.u32 %v314
        %v317 = vmul.u32.u64.compose %v313, %v308
        %v318 = vextract.low.u32 %v317
        %v319 = vextract.high.u32 %v317
        %v320 = vmul.u32 %v313, %v304
        %v321 = vadd.s32 %v316, %v318
        %vm322 = vc.u32 %v316, %v318
        %v323 = vadd.s32 %v319, 1
        %v324 = vsel %vm322, %v323, %v319
        %v325 = vadd.s32 %v320, %v324
        %v326 = vadd.s32 %v325, 536870912
        %v327 = vshrl.u32 %v326, 30
        %v328 = vshll.u32 %v327, 30
        %v329 = vsub.s32 %v325, %v328
        %vm330 = vcmp.lt.s32.totalorder %v329, 0
        %v331 = vsub.s32 0, %v329
        %v332 = vsel %vm330, %v331, %v329
        %v333 = vclz %v332
        %v334 = vsub.s32 %v333, 2
        %vm335 = vcmp.gt.s32.totalorder 0, %v334
        %v336 = vsel %vm335, 0, %v334
        %v337 = vsub.s32 32, %v336
        %v338 = vshll.u32 %v329, %v336
        %v339 = vshrl.u32 %v321, %v337
        %v340 = vor.u32 %v338, %v339
        %v341 = vsub.s32 4294967266, %v336
        %v342 = vadd.s32 %v341, 127
        %v343 = vshll.u32 %v342, 23
        %v344 = vor.u32 4788187, %v343
        %v345 = vand.u32 2147483647, %v344
        %v347 = vcvt.s32.f32 %v340
        %v348 = vmul.f32 %v347, %v345
        %v349 = vxor.u32 %v348, 2147483648
        %v350 = vsel %vm267, %v349, %v348
        %v351 = vsub.s32 4, %v327
        %v352 = vsel %vm267, %v351, %v327
        %v353 = vsel %vm266, %v264, %v350
        %v354 = vsel %vm266, 0, %v352
        %v355 = vcosq.f32.pop %v353
        %v356 = vsinq.f32.pop %v353
        %vm357 = vweird.f32 %v264
        %v358 = vadd.s32 %v354, 3
        %v359 = vand.u32 %v358, 3
        %vm360 = vcmp.lt.s32.totalorder %v359, 2
        %vm361 = vcmp.eq.s32.totalorder %v359, 0
        %v362 = vxor.u32 %v356, 2147483648
        %v363 = vsel %vm361, %v355, %v362
        %vm364 = vcmp.eq.s32.totalorder %v359, 2
        %v365 = vxor.u32 %v355, 2147483648
        %v366 = vsel %vm364, %v365, %v356
        %v367 = vsel %vm360, %v363, %v366
        %v368 = vsel %vm357, nan, %v367
        %v369 = vmul.f32 %v368, %v368
        %370 = vset.pattern.permute.xlu0 1
        %371 = vperm.xlu0 %370, %v256
        %v372 = vpop.permute.xlu0 %371
        %v374 = vmul.f32 %v372, %v369
        %v375 = vadd.f32 %v255, %v374
        %vm376 = vcmask 1047680
        %377 = vrot.lane.b32.xlu0 %v375, 16
        %v378 = vpop.permute.xlu0 %377
        %v379 = vsel %vm376, %v378, %v375
        %380 = vrot.lane.b32.xlu0 %v379, 16
        %v381 = vpop.permute.xlu0 %380
        %v382 = vsel %vm376, %v381, %v375
        %vm383 = vcmp.ge.s32.totalorder %v258, 2
        %v384 = vsel %vm383, 1, 0
        %vm385 = vcmp.eq.s32.totalorder %v384, 1
        %387 = vrot.lane.b32.xlu0 %v382, 114
        %v388 = vpop.permute.xlu0 %387
        %v390 = vsel %vm385, %v388, 0.0
        %v391 = vld [vmem:[#allocation7] sm:$0xf]
        %s392 = scalar_lea.vmem [#allocation7], 4
        %v393 = vld [vmem:[%s392] sm:$0xf]
        %vm394 = vcmask 31744
        %v396 = vsel %vm394, %v393, 0
        %vm398 = vcmask 1043456
        %v400 = vsel %vm398, %v375, 0
        %402 = vmatprep.subr.mxu0 0.0
        %403 = vmatpush1.msra.mxu0 %v400
        %404 = vmatprep.subr.mxu0 0.0
        %405 = vmatpush1.msra.mxu0 0.0
        %406 = vmatprep.subr.mxu0 0.0
        %407 = vmatpush1.msra.mxu0 0.0
        %408 = vmatprep.subr.mxu0 0.0
        %409 = vmatpush1.msra.mxu0 0.0
        %410 = vmatprep.subr.mxu0 0.0
        %411 = vmatpush1.msra.mxu0 0.0
        %412 = vmatprep.subr.mxu0 0.0
        %413 = vmatpush1.msra.mxu0 0.0
        %414 = vmatprep.subr.mxu0 0.0
        %415 = vmatpush1.msra.mxu0 0.0
        %416 = vmatprep.subr.mxu0 0.0
        %417 = vmatpush1.msra.mxu0 0.0
        %418 = vmatprep.subr.mxu0 0.0
        %419 = vmatpush1.msra.mxu0 0.0
        %420 = vmatprep.subr.mxu0 0.0
        %421 = vmatpush1.msra.mxu0 0.0
        %422 = vmatprep.subr.mxu0 0.0
        %423 = vmatpush1.msra.mxu0 0.0
        %424 = vmatprep.subr.mxu0 0.0
        %425 = vmatpush1.msra.mxu0 0.0
        %426 = vmatprep.subr.mxu0 0.0
        %427 = vmatpush1.msra.mxu0 0.0
        %428 = vmatprep.subr.mxu0 0.0
        %429 = vmatpush1.msra.mxu0 0.0
        %430 = vmatprep.subr.mxu0 0.0
        %431 = vmatpush1.msra.mxu0 0.0
        %432 = vmatprep.subr.mxu0 0.0
        %433 = vmatpush1.msra.mxu0 0.0
        %434 = vmatprep.subr.mxu0 0.0
        %435 = vmatpush1.msra.mxu0 0.0
        %436 = vmatprep.subr.mxu0 0.0
        %437 = vmatpush1.msra.mxu0 0.0
        %438 = vmatprep.subr.mxu0 0.0
        %439 = vmatpush1.msra.mxu0 0.0
        %440 = vmatprep.subr.mxu0 0.0
        %441 = vmatpush1.msra.mxu0 0.0
        %442 = vmatprep.subr.mxu0 0.0
        %443 = vmatpush1.msra.mxu0 0.0
        %444 = vmatprep.subr.mxu0 0.0
        %445 = vmatpush1.msra.mxu0 0.0
        %446 = vmatprep.subr.mxu0 0.0
        %447 = vmatpush1.msra.mxu0 0.0
        %448 = vmatprep.subr.mxu0 0.0
        %449 = vmatpush1.msra.mxu0 0.0
        %450 = vmatprep.subr.mxu0 0.0
        %451 = vmatpush1.msra.mxu0 0.0
        %452 = vmatprep.subr.mxu0 0.0
        %453 = vmatpush1.msra.mxu0 0.0
        %454 = vmatprep.subr.mxu0 0.0
        %455 = vmatpush1.msra.mxu0 0.0
        %456 = vmatprep.subr.mxu0 0.0
        %457 = vmatpush1.msra.mxu0 0.0
        %458 = vmatprep.subr.mxu0 0.0
        %459 = vmatpush1.msra.mxu0 0.0
        %460 = vmatprep.subr.mxu0 0.0
        %461 = vmatpush1.msra.mxu0 0.0
        %462 = vmatprep.subr.mxu0 0.0
        %463 = vmatpush1.msra.mxu0 0.0
        %464 = vmatprep.subr.mxu0 0.0
        %465 = vmatpush1.msra.mxu0 0.0
        %466 = vmatprep.mubr.f32.mxu0 0.0
        %467 = vmatmul.mubr.f32.gmra.mrb[0].mxu0 %v396
        %v468 = vpop.f32.mrb[0].mxu0
        %v469 = vadd.f32 0.0, %v468
        %v470 = vpop.f32.mrb[0].mxu0
        %471 = vdwg.mxu0
        %v473 = vsel %vm394, %v391, 0
        %v476 = vsel %vm398, %v390, 0
        %478 = vmatprep.subr.mxu0 0.0
        %479 = vmatpush1.msra.mxu0 %v476
        %480 = vmatprep.subr.mxu0 0.0
        %481 = vmatpush1.msra.mxu0 0.0
        %482 = vmatprep.subr.mxu0 0.0
        %483 = vmatpush1.msra.mxu0 0.0
        %484 = vmatprep.subr.mxu0 0.0
        %485 = vmatpush1.msra.mxu0 0.0
        %486 = vmatprep.subr.mxu0 0.0
        %487 = vmatpush1.msra.mxu0 0.0
        %488 = vmatprep.subr.mxu0 0.0
        %489 = vmatpush1.msra.mxu0 0.0
        %490 = vmatprep.subr.mxu0 0.0
        %491 = vmatpush1.msra.mxu0 0.0
        %492 = vmatprep.subr.mxu0 0.0
        %493 = vmatpush1.msra.mxu0 0.0
        %494 = vmatprep.subr.mxu0 0.0
        %495 = vmatpush1.msra.mxu0 0.0
        %496 = vmatprep.subr.mxu0 0.0
        %497 = vmatpush1.msra.mxu0 0.0
        %498 = vmatprep.subr.mxu0 0.0
        %499 = vmatpush1.msra.mxu0 0.0
        %500 = vmatprep.subr.mxu0 0.0
        %501 = vmatpush1.msra.mxu0 0.0
        %502 = vmatprep.subr.mxu0 0.0
        %503 = vmatpush1.msra.mxu0 0.0
        %504 = vmatprep.subr.mxu0 0.0
        %505 = vmatpush1.msra.mxu0 0.0
        %506 = vmatprep.subr.mxu0 0.0
        %507 = vmatpush1.msra.mxu0 0.0
        %508 = vmatprep.subr.mxu0 0.0
        %509 = vmatpush1.msra.mxu0 0.0
        %510 = vmatprep.subr.mxu0 0.0
        %511 = vmatpush1.msra.mxu0 0.0
        %512 = vmatprep.subr.mxu0 0.0
        %513 = vmatpush1.msra.mxu0 0.0
        %514 = vmatprep.subr.mxu0 0.0
        %515 = vmatpush1.msra.mxu0 0.0
        %516 = vmatprep.subr.mxu0 0.0
        %517 = vmatpush1.msra.mxu0 0.0
        %518 = vmatprep.subr.mxu0 0.0
        %519 = vmatpush1.msra.mxu0 0.0
        %520 = vmatprep.subr.mxu0 0.0
        %521 = vmatpush1.msra.mxu0 0.0
        %522 = vmatprep.subr.mxu0 0.0
        %523 = vmatpush1.msra.mxu0 0.0
        %524 = vmatprep.subr.mxu0 0.0
        %525 = vmatpush1.msra.mxu0 0.0
        %526 = vmatprep.subr.mxu0 0.0
        %527 = vmatpush1.msra.mxu0 0.0
        %528 = vmatprep.subr.mxu0 0.0
        %529 = vmatpush1.msra.mxu0 0.0
        %530 = vmatprep.subr.mxu0 0.0
        %531 = vmatpush1.msra.mxu0 0.0
        %532 = vmatprep.subr.mxu0 0.0
        %533 = vmatpush1.msra.mxu0 0.0
        %534 = vmatprep.subr.mxu0 0.0
        %535 = vmatpush1.msra.mxu0 0.0
        %536 = vmatprep.subr.mxu0 0.0
        %537 = vmatpush1.msra.mxu0 0.0
        %538 = vmatprep.subr.mxu0 0.0
        %539 = vmatpush1.msra.mxu0 0.0
        %540 = vmatprep.subr.mxu0 0.0
        %541 = vmatpush1.msra.mxu0 0.0
        %542 = vmatprep.mubr.f32.mxu0 0.0
        %543 = vmatmul.mubr.f32.gmra.mrb[0].mxu0 %v473
        %v544 = vpop.f32.mrb[0].mxu0
        %v545 = vadd.f32 %v469, %v544
        %v546 = vpop.f32.mrb[0].mxu0
        %547 = vdwg.mxu0
        %vm548 = vcmp.lt.s32.totalorder %v258, 14
        %v549 = vsel %vm548, 1, 0
        %vm550 = vcmp.eq.s32.totalorder %v549, 1
        %551 = vrot.lane.b32.xlu0 %v382, 126
        %v552 = vpop.permute.xlu0 %551
        %v554 = vsel %vm550, %v552, 0.0
        %s555 = scalar_lea.vmem [#allocation7], 8
        %v556 = vld [vmem:[%s555] sm:$0xf]
        %v558 = vsel %vm394, %v556, 0
        %v561 = vsel %vm398, %v554, 0
        %563 = vmatprep.subr.mxu0 0.0
        %564 = vmatpush1.msra.mxu0 %v561
        %565 = vmatprep.subr.mxu0 0.0
        %566 = vmatpush1.msra.mxu0 0.0
        %567 = vmatprep.subr.mxu0 0.0
        %568 = vmatpush1.msra.mxu0 0.0
        %569 = vmatprep.subr.mxu0 0.0
        %570 = vmatpush1.msra.mxu0 0.0
        %571 = vmatprep.subr.mxu0 0.0
        %572 = vmatpush1.msra.mxu0 0.0
        %573 = vmatprep.subr.mxu0 0.0
        %574 = vmatpush1.msra.mxu0 0.0
        %575 = vmatprep.subr.mxu0 0.0
        %576 = vmatpush1.msra.mxu0 0.0
        %577 = vmatprep.subr.mxu0 0.0
        %578 = vmatpush1.msra.mxu0 0.0
        %579 = vmatprep.subr.mxu0 0.0
        %580 = vmatpush1.msra.mxu0 0.0
        %581 = vmatprep.subr.mxu0 0.0
        %582 = vmatpush1.msra.mxu0 0.0
        %583 = vmatprep.subr.mxu0 0.0
        %584 = vmatpush1.msra.mxu0 0.0
        %585 = vmatprep.subr.mxu0 0.0
        %586 = vmatpush1.msra.mxu0 0.0
        %587 = vmatprep.subr.mxu0 0.0
        %588 = vmatpush1.msra.mxu0 0.0
        %589 = vmatprep.subr.mxu0 0.0
        %590 = vmatpush1.msra.mxu0 0.0
        %591 = vmatprep.subr.mxu0 0.0
        %592 = vmatpush1.msra.mxu0 0.0
        %593 = vmatprep.subr.mxu0 0.0
        %594 = vmatpush1.msra.mxu0 0.0
        %595 = vmatprep.subr.mxu0 0.0
        %596 = vmatpush1.msra.mxu0 0.0
        %597 = vmatprep.subr.mxu0 0.0
        %598 = vmatpush1.msra.mxu0 0.0
        %599 = vmatprep.subr.mxu0 0.0
        %600 = vmatpush1.msra.mxu0 0.0
        %601 = vmatprep.subr.mxu0 0.0
        %602 = vmatpush1.msra.mxu0 0.0
        %603 = vmatprep.subr.mxu0 0.0
        %604 = vmatpush1.msra.mxu0 0.0
        %605 = vmatprep.subr.mxu0 0.0
        %606 = vmatpush1.msra.mxu0 0.0
        %607 = vmatprep.subr.mxu0 0.0
        %608 = vmatpush1.msra.mxu0 0.0
        %609 = vmatprep.subr.mxu0 0.0
        %610 = vmatpush1.msra.mxu0 0.0
        %611 = vmatprep.subr.mxu0 0.0
        %612 = vmatpush1.msra.mxu0 0.0
        %613 = vmatprep.subr.mxu0 0.0
        %614 = vmatpush1.msra.mxu0 0.0
        %615 = vmatprep.subr.mxu0 0.0
        %616 = vmatpush1.msra.mxu0 0.0
        %617 = vmatprep.subr.mxu0 0.0
        %618 = vmatpush1.msra.mxu0 0.0
        %619 = vmatprep.subr.mxu0 0.0
        %620 = vmatpush1.msra.mxu0 0.0
        %621 = vmatprep.subr.mxu0 0.0
        %622 = vmatpush1.msra.mxu0 0.0
        %623 = vmatprep.subr.mxu0 0.0
        %624 = vmatpush1.msra.mxu0 0.0
        %625 = vmatprep.subr.mxu0 0.0
        %626 = vmatpush1.msra.mxu0 0.0
        %627 = vmatprep.mubr.f32.mxu0 0.0
        %628 = vmatmul.mubr.f32.gmra.mrb[0].mxu0 %v558
        %v629 = vpop.f32.mrb[0].mxu0
        %v630 = vadd.f32 0.0, %v629
        %v631 = vpop.f32.mrb[0].mxu0
        %632 = vdwg.mxu0
        %v633 = vadd.f32 %v545, %v630
        %634 = vset.pattern.permute.xlu0 2
        %635 = vperm.xlu0 %634, %v256
        %v636 = vpop.permute.xlu0 %635
        %v638 = vadd.f32 %v633, %v636
        %vm639 = vcmask 125952
        %v640 = vsel %vm639, %v638, 0.0
        %641 = vadd.xlane.f32.xlu0 %v640
        %v642 = vpop.xlane.xlu0 %641
        %v643 = vmul.f32 %v638, %v638
        %v644 = vsel %vm639, %v643, 0.0
        %645 = vadd.xlane.f32.xlu0 %v644
        %v646 = vpop.xlane.xlu0 %645
        %v647 = vmul.f32 %v642, 0.0625
        %v648 = vmul.f32 %v646, 0.0625
        %v649 = vmul.f32 %v647, %v647
        %v650 = vsub.f32 %v648, %v649
        %v651 = vmax.f32 %v650, 0.0
        %v652 = vadd.f32 %v651, 1e-05
        %v653 = vrsqrt.pop %v652
        %v654 = vmul.f32 %v653, %v256
        %v655 = vsub.f32 %v638, %v647
        %657 = vset.pattern.permute.xlu0 3
        %658 = vperm.xlu0 %657, %v654
        %v659 = vpop.permute.xlu0 %658
        %v661 = vmul.f32 %v655, %v659
        %662 = vset.pattern.permute.xlu0 4
        %663 = vperm.xlu0 %662, %v256
        %v664 = vpop.permute.xlu0 %663
        %v666 = vadd.f32 %v661, %v664
        %667 = vset.pattern.permute.xlu0 5
        %668 = vperm.xlu0 %667, %v256
        %v669 = vpop.permute.xlu0 %668
        %v671 = vmul.f32 %v669, %v666
        %v672 = vand.u32 2147483647, %v671
        %vm673 = vcmp.le.f32.partialorder %v672, 0.7853982
        %vm674 = vcmp.lt.s32.totalorder %v671, 0
        %v675 = vand.u32 %v671, 2139095040
        %v676 = vshrl.u32 %v675, 23
        %v677 = vsub.s32 %v676, 127
        %v678 = vand.u32 2147483647, %v671
        %v679 = vand.u32 %v678, 8388607
        %v680 = vor.u32 %v679, 8388608
        %v681 = vsub.s32 0, %v680
        %v682 = vadd.s32 %v677, 1
        %vm683 = vcmp.gt.s32.totalorder %v682, 0
        %v684 = vsel %vm683, %v682, 0
        %v685 = vshrl.u32 %v684, 5
        %v686 = vand.u32 %v684, 31
        %v687 = vsub.s32 32, %v686
        %v688 = vshrl.u32 683565275, %v687
        %v689 = vshll.u32 683565275, %v686
        %v690 = vshrl.u32 2475754826, %v687
        %v691 = vor.u32 %v689, %v690
        %v692 = vshll.u32 2475754826, %v686
        %v693 = vshrl.u32 2131351028, %v687
        %v694 = vor.u32 %v692, %v693
        %v695 = vshll.u32 2131351028, %v686
        %v696 = vshrl.u32 2102212464, %v687
        %v697 = vor.u32 %v695, %v696
        %v698 = vshll.u32 2102212464, %v686
        %v699 = vshrl.u32 920167782, %v687
        %v700 = vor.u32 %v698, %v699
        %v701 = vshll.u32 920167782, %v686
        %v702 = vshrl.u32 1326507024, %v687
        %v703 = vor.u32 %v701, %v702
        %vm704 = vcmp.lt.s32.totalorder %v685, 1
        %vm705 = vcmp.lt.s32.totalorder %v685, 2
        %vm706 = vcmp.lt.s32.totalorder %v685, 3
        %vm707 = vcmp.lt.s32.totalorder %v685, 4
        %v708 = vsel %vm704, %v688, %v691
        %v709 = vsel %vm707, %v697, 2102212464
        %v710 = vsel %vm706, %v694, %v709
        %v711 = vsel %vm705, %v708, %v710
        %v712 = vsel %vm704, %v691, %v694
        %v713 = vsel %vm707, %v700, 920167782
        %v714 = vsel %vm706, %v697, %v713
        %v715 = vsel %vm705, %v712, %v714
        %v716 = vsel %vm704, %v694, %v697
        %v717 = vsel %vm707, %v703, 1326507024
        %v718 = vsel %vm706, %v700, %v717
        %v719 = vsel %vm705, %v716, %v718
        %v720 = vshll.u32 %v680, 8
        %v721 = vmul.u32.u64.compose %v720, %v719
        %v722 = vextract.low.u32 %v721
        %v723 = vextract.high.u32 %v721
        %v724 = vmul.u32.u64.compose %v720, %v715
        %v725 = vextract.low.u32 %v724
        %v726 = vextract.high.u32 %v724
        %v727 = vmul.u32 %v720, %v711
        %v728 = vadd.s32 %v723, %v725
        %vm729 = vc.u32 %v723, %v725
        %v730 = vadd.s32 %v726, 1
        %v731 = vsel %vm729, %v730, %v726
        %v732 = vadd.s32 %v727, %v731
        %v733 = vadd.s32 %v732, 536870912
        %v734 = vshrl.u32 %v733, 30
        %v735 = vshll.u32 %v734, 30
        %v736 = vsub.s32 %v732, %v735
        %vm737 = vcmp.lt.s32.totalorder %v736, 0
        %v738 = vsub.s32 0, %v736
        %v739 = vsel %vm737, %v738, %v736
        %v740 = vclz %v739
        %v741 = vsub.s32 %v740, 2
        %vm742 = vcmp.gt.s32.totalorder 0, %v741
        %v743 = vsel %vm742, 0, %v741
        %v744 = vsub.s32 32, %v743
        %v745 = vshll.u32 %v736, %v743
        %v746 = vshrl.u32 %v728, %v744
        %v747 = vor.u32 %v745, %v746
        %v748 = vsub.s32 4294967266, %v743
        %v749 = vadd.s32 %v748, 127
        %v750 = vshll.u32 %v749, 23
        %v751 = vor.u32 4788187, %v750
        %v752 = vand.u32 2147483647, %v751
        %v754 = vcvt.s32.f32 %v747
        %v755 = vmul.f32 %v754, %v752
        %v756 = vxor.u32 %v755, 2147483648
        %v757 = vsel %vm674, %v756, %v755
        %v758 = vsub.s32 4, %v734
        %v759 = vsel %vm674, %v758, %v734
        %v760 = vsel %vm673, %v671, %v757
        %v761 = vsel %vm673, 0, %v759
        %v762 = vcosq.f32.pop %v760
        %v763 = vsinq.f32.pop %v760
        %vm764 = vweird.f32 %v671
        %v765 = vadd.s32 %v761, 3
        %v766 = vand.u32 %v765, 3
        %vm767 = vcmp.lt.s32.totalorder %v766, 2
        %vm768 = vcmp.eq.s32.totalorder %v766, 0
        %v769 = vxor.u32 %v763, 2147483648
        %v770 = vsel %vm768, %v762, %v769
        %vm771 = vcmp.eq.s32.totalorder %v766, 2
        %v772 = vxor.u32 %v762, 2147483648
        %v773 = vsel %vm771, %v772, %v763
        %v774 = vsel %vm767, %v770, %v773
        %v775 = vsel %vm764, nan, %v774
        %v776 = vmul.f32 %v775, %v775
        %777 = vset.pattern.permute.xlu0 6
        %778 = vperm.xlu0 %777, %v256
        %v779 = vpop.permute.xlu0 %778
        %v781 = vmul.f32 %v779, %v776
        %v782 = vadd.f32 %v666, %v781
        %783 = vrot.lane.b32.xlu0 %v782, 16
        %v784 = vpop.permute.xlu0 %783
        %v785 = vsel %vm376, %v784, %v782
        %786 = vrot.lane.b32.xlu0 %v785, 16
        %v787 = vpop.permute.xlu0 %786
        %v788 = vsel %vm376, %v787, %v782
        %vm789 = vcmp.ge.s32.totalorder %v258, 1
        %v790 = vsel %vm789, 1, 0
        %vm791 = vcmp.eq.s32.totalorder %v790, 1
        %793 = vrot.lane.b32.xlu0 %v788, 113
        %v794 = vpop.permute.xlu0 %793
        %v796 = vsel %vm791, %v794, 0.0
        %v797 = vld [vmem:[#allocation8] sm:$0xf]
        %s798 = scalar_lea.vmem [#allocation8], 4
        %v799 = vld [vmem:[%s798] sm:$0xf]
        %v801 = vsel %vm394, %v799, 0
        %v804 = vsel %vm398, %v782, 0
        %806 = vmatprep.subr.mxu0 0.0
        %807 = vmatpush1.msra.mxu0 %v804
        %808 = vmatprep.subr.mxu0 0.0
        %809 = vmatpush1.msra.mxu0 0.0
        %810 = vmatprep.subr.mxu0 0.0
        %811 = vmatpush1.msra.mxu0 0.0
        %812 = vmatprep.subr.mxu0 0.0
        %813 = vmatpush1.msra.mxu0 0.0
        %814 = vmatprep.subr.mxu0 0.0
        %815 = vmatpush1.msra.mxu0 0.0
        %816 = vmatprep.subr.mxu0 0.0
        %817 = vmatpush1.msra.mxu0 0.0
        %818 = vmatprep.subr.mxu0 0.0
        %819 = vmatpush1.msra.mxu0 0.0
        %820 = vmatprep.subr.mxu0 0.0
        %821 = vmatpush1.msra.mxu0 0.0
        %822 = vmatprep.subr.mxu0 0.0
        %823 = vmatpush1.msra.mxu0 0.0
        %824 = vmatprep.subr.mxu0 0.0
        %825 = vmatpush1.msra.mxu0 0.0
        %826 = vmatprep.subr.mxu0 0.0
        %827 = vmatpush1.msra.mxu0 0.0
        %828 = vmatprep.subr.mxu0 0.0
        %829 = vmatpush1.msra.mxu0 0.0
        %830 = vmatprep.subr.mxu0 0.0
        %831 = vmatpush1.msra.mxu0 0.0
        %832 = vmatprep.subr.mxu0 0.0
        %833 = vmatpush1.msra.mxu0 0.0
        %834 = vmatprep.subr.mxu0 0.0
        %835 = vmatpush1.msra.mxu0 0.0
        %836 = vmatprep.subr.mxu0 0.0
        %837 = vmatpush1.msra.mxu0 0.0
        %838 = vmatprep.subr.mxu0 0.0
        %839 = vmatpush1.msra.mxu0 0.0
        %840 = vmatprep.subr.mxu0 0.0
        %841 = vmatpush1.msra.mxu0 0.0
        %842 = vmatprep.subr.mxu0 0.0
        %843 = vmatpush1.msra.mxu0 0.0
        %844 = vmatprep.subr.mxu0 0.0
        %845 = vmatpush1.msra.mxu0 0.0
        %846 = vmatprep.subr.mxu0 0.0
        %847 = vmatpush1.msra.mxu0 0.0
        %848 = vmatprep.subr.mxu0 0.0
        %849 = vmatpush1.msra.mxu0 0.0
        %850 = vmatprep.subr.mxu0 0.0
        %851 = vmatpush1.msra.mxu0 0.0
        %852 = vmatprep.subr.mxu0 0.0
        %853 = vmatpush1.msra.mxu0 0.0
        %854 = vmatprep.subr.mxu0 0.0
        %855 = vmatpush1.msra.mxu0 0.0
        %856 = vmatprep.subr.mxu0 0.0
        %857 = vmatpush1.msra.mxu0 0.0
        %858 = vmatprep.subr.mxu0 0.0
        %859 = vmatpush1.msra.mxu0 0.0
        %860 = vmatprep.subr.mxu0 0.0
        %861 = vmatpush1.msra.mxu0 0.0
        %862 = vmatprep.subr.mxu0 0.0
        %863 = vmatpush1.msra.mxu0 0.0
        %864 = vmatprep.subr.mxu0 0.0
        %865 = vmatpush1.msra.mxu0 0.0
        %866 = vmatprep.subr.mxu0 0.0
        %867 = vmatpush1.msra.mxu0 0.0
        %868 = vmatprep.subr.mxu0 0.0
        %869 = vmatpush1.msra.mxu0 0.0
        %870 = vmatprep.mubr.f32.mxu0 0.0
        %871 = vmatmul.mubr.f32.gmra.mrb[0].mxu0 %v801
        %v872 = vpop.f32.mrb[0].mxu0
        %v873 = vadd.f32 0.0, %v872
        %v874 = vpop.f32.mrb[0].mxu0
        %875 = vdwg.mxu0
        %v877 = vsel %vm394, %v797, 0
        %v880 = vsel %vm398, %v796, 0
        %882 = vmatprep.subr.mxu0 0.0
        %883 = vmatpush1.msra.mxu0 %v880
        %884 = vmatprep.subr.mxu0 0.0
        %885 = vmatpush1.msra.mxu0 0.0
        %886 = vmatprep.subr.mxu0 0.0
        %887 = vmatpush1.msra.mxu0 0.0
        %888 = vmatprep.subr.mxu0 0.0
        %889 = vmatpush1.msra.mxu0 0.0
        %890 = vmatprep.subr.mxu0 0.0
        %891 = vmatpush1.msra.mxu0 0.0
        %892 = vmatprep.subr.mxu0 0.0
        %893 = vmatpush1.msra.mxu0 0.0
        %894 = vmatprep.subr.mxu0 0.0
        %895 = vmatpush1.msra.mxu0 0.0
        %896 = vmatprep.subr.mxu0 0.0
        %897 = vmatpush1.msra.mxu0 0.0
        %898 = vmatprep.subr.mxu0 0.0
        %899 = vmatpush1.msra.mxu0 0.0
        %900 = vmatprep.subr.mxu0 0.0
        %901 = vmatpush1.msra.mxu0 0.0
        %902 = vmatprep.subr.mxu0 0.0
        %903 = vmatpush1.msra.mxu0 0.0
        %904 = vmatprep.subr.mxu0 0.0
        %905 = vmatpush1.msra.mxu0 0.0
        %906 = vmatprep.subr.mxu0 0.0
        %907 = vmatpush1.msra.mxu0 0.0
        %908 = vmatprep.subr.mxu0 0.0
        %909 = vmatpush1.msra.mxu0 0.0
        %910 = vmatprep.subr.mxu0 0.0
        %911 = vmatpush1.msra.mxu0 0.0
        %912 = vmatprep.subr.mxu0 0.0
        %913 = vmatpush1.msra.mxu0 0.0
        %914 = vmatprep.subr.mxu0 0.0
        %915 = vmatpush1.msra.mxu0 0.0
        %916 = vmatprep.subr.mxu0 0.0
        %917 = vmatpush1.msra.mxu0 0.0
        %918 = vmatprep.subr.mxu0 0.0
        %919 = vmatpush1.msra.mxu0 0.0
        %920 = vmatprep.subr.mxu0 0.0
        %921 = vmatpush1.msra.mxu0 0.0
        %922 = vmatprep.subr.mxu0 0.0
        %923 = vmatpush1.msra.mxu0 0.0
        %924 = vmatprep.subr.mxu0 0.0
        %925 = vmatpush1.msra.mxu0 0.0
        %926 = vmatprep.subr.mxu0 0.0
        %927 = vmatpush1.msra.mxu0 0.0
        %928 = vmatprep.subr.mxu0 0.0
        %929 = vmatpush1.msra.mxu0 0.0
        %930 = vmatprep.subr.mxu0 0.0
        %931 = vmatpush1.msra.mxu0 0.0
        %932 = vmatprep.subr.mxu0 0.0
        %933 = vmatpush1.msra.mxu0 0.0
        %934 = vmatprep.subr.mxu0 0.0
        %935 = vmatpush1.msra.mxu0 0.0
        %936 = vmatprep.subr.mxu0 0.0
        %937 = vmatpush1.msra.mxu0 0.0
        %938 = vmatprep.subr.mxu0 0.0
        %939 = vmatpush1.msra.mxu0 0.0
        %940 = vmatprep.subr.mxu0 0.0
        %941 = vmatpush1.msra.mxu0 0.0
        %942 = vmatprep.subr.mxu0 0.0
        %943 = vmatpush1.msra.mxu0 0.0
        %944 = vmatprep.subr.mxu0 0.0
        %945 = vmatpush1.msra.mxu0 0.0
        %946 = vmatprep.mubr.f32.mxu0 0.0
        %947 = vmatmul.mubr.f32.gmra.mrb[0].mxu0 %v877
        %v948 = vpop.f32.mrb[0].mxu0
        %v949 = vadd.f32 %v873, %v948
        %v950 = vpop.f32.mrb[0].mxu0
        %951 = vdwg.mxu0
        %vm952 = vcmp.lt.s32.totalorder %v258, 15
        %v953 = vsel %vm952, 1, 0
        %vm954 = vcmp.eq.s32.totalorder %v953, 1
        %955 = vrot.lane.b32.xlu0 %v788, 127
        %v956 = vpop.permute.xlu0 %955
        %v958 = vsel %vm954, %v956, 0.0
        %s959 = scalar_lea.vmem [#allocation8], 8
        %v960 = vld [vmem:[%s959] sm:$0xf]
        %v962 = vsel %vm394, %v960, 0
        %v965 = vsel %vm398, %v958, 0
        %967 = vmatprep.subr.mxu0 0.0
        %968 = vmatpush1.msra.mxu0 %v965
        %969 = vmatprep.subr.mxu0 0.0
        %970 = vmatpush1.msra.mxu0 0.0
        %971 = vmatprep.subr.mxu0 0.0
        %972 = vmatpush1.msra.mxu0 0.0
        %973 = vmatprep.subr.mxu0 0.0
        %974 = vmatpush1.msra.mxu0 0.0
        %975 = vmatprep.subr.mxu0 0.0
        %976 = vmatpush1.msra.mxu0 0.0
        %977 = vmatprep.subr.mxu0 0.0
        %978 = vmatpush1.msra.mxu0 0.0
        %979 = vmatprep.subr.mxu0 0.0
        %980 = vmatpush1.msra.mxu0 0.0
        %981 = vmatprep.subr.mxu0 0.0
        %982 = vmatpush1.msra.mxu0 0.0
        %983 = vmatprep.subr.mxu0 0.0
        %984 = vmatpush1.msra.mxu0 0.0
        %985 = vmatprep.subr.mxu0 0.0
        %986 = vmatpush1.msra.mxu0 0.0
        %987 = vmatprep.subr.mxu0 0.0
        %988 = vmatpush1.msra.mxu0 0.0
        %989 = vmatprep.subr.mxu0 0.0
        %990 = vmatpush1.msra.mxu0 0.0
        %991 = vmatprep.subr.mxu0 0.0
        %992 = vmatpush1.msra.mxu0 0.0
        %993 = vmatprep.subr.mxu0 0.0
        %994 = vmatpush1.msra.mxu0 0.0
        %995 = vmatprep.subr.mxu0 0.0
        %996 = vmatpush1.msra.mxu0 0.0
        %997 = vmatprep.subr.mxu0 0.0
        %998 = vmatpush1.msra.mxu0 0.0
        %999 = vmatprep.subr.mxu0 0.0
        %1000 = vmatpush1.msra.mxu0 0.0
        %1001 = vmatprep.subr.mxu0 0.0
        %1002 = vmatpush1.msra.mxu0 0.0
        %1003 = vmatprep.subr.mxu0 0.0
        %1004 = vmatpush1.msra.mxu0 0.0
        %1005 = vmatprep.subr.mxu0 0.0
        %1006 = vmatpush1.msra.mxu0 0.0
        %1007 = vmatprep.subr.mxu0 0.0
        %1008 = vmatpush1.msra.mxu0 0.0
        %1009 = vmatprep.subr.mxu0 0.0
        %1010 = vmatpush1.msra.mxu0 0.0
        %1011 = vmatprep.subr.mxu0 0.0
        %1012 = vmatpush1.msra.mxu0 0.0
        %1013 = vmatprep.subr.mxu0 0.0
        %1014 = vmatpush1.msra.mxu0 0.0
        %1015 = vmatprep.subr.mxu0 0.0
        %1016 = vmatpush1.msra.mxu0 0.0
        %1017 = vmatprep.subr.mxu0 0.0
        %1018 = vmatpush1.msra.mxu0 0.0
        %1019 = vmatprep.subr.mxu0 0.0
        %1020 = vmatpush1.msra.mxu0 0.0
        %1021 = vmatprep.subr.mxu0 0.0
        %1022 = vmatpush1.msra.mxu0 0.0
        %1023 = vmatprep.subr.mxu0 0.0
        %1024 = vmatpush1.msra.mxu0 0.0
        %1025 = vmatprep.subr.mxu0 0.0
        %1026 = vmatpush1.msra.mxu0 0.0
        %1027 = vmatprep.subr.mxu0 0.0
        %1028 = vmatpush1.msra.mxu0 0.0
        %1029 = vmatprep.subr.mxu0 0.0
        %1030 = vmatpush1.msra.mxu0 0.0
        %1031 = vmatprep.mubr.f32.mxu0 0.0
        %1032 = vmatmul.mubr.f32.gmra.mrb[0].mxu0 %v962
        %v1033 = vpop.f32.mrb[0].mxu0
        %v1034 = vadd.f32 0.0, %v1033
        %v1035 = vpop.f32.mrb[0].mxu0
        %1036 = vdwg.mxu0
        %v1037 = vadd.f32 %v949, %v1034
        %1038 = vset.pattern.permute.xlu0 7
        %1039 = vperm.xlu0 %1038, %v256
        %v1040 = vpop.permute.xlu0 %1039
        %v1042 = vadd.f32 %v1037, %v1040
        %v1043 = vsel %vm639, %v1042, 0.0
        %1044 = vadd.xlane.f32.xlu0 %v1043
        %v1045 = vpop.xlane.xlu0 %1044
        %v1046 = vmul.f32 %v1042, %v1042
        %v1047 = vsel %vm639, %v1046, 0.0
        %1048 = vadd.xlane.f32.xlu0 %v1047
        %v1049 = vpop.xlane.xlu0 %1048
        %v1050 = vmul.f32 %v1045, 0.0625
        %v1051 = vmul.f32 %v1049, 0.0625
        %v1052 = vmul.f32 %v1050, %v1050
        %v1053 = vsub.f32 %v1051, %v1052
        %v1054 = vmax.f32 %v1053, 0.0
        %v1055 = vadd.f32 %v1054, 1e-05
        %v1056 = vrsqrt.pop %v1055
        %v1057 = vmul.f32 %v1056, %v256
        %v1058 = vsub.f32 %v1042, %v1050
        %1060 = vset.pattern.permute.xlu0 8
        %1061 = vperm.xlu0 %1060, %v1057
        %v1062 = vpop.permute.xlu0 %1061
        %v1064 = vmul.f32 %v1058, %v1062
        %1065 = vset.pattern.permute.xlu0 9
        %1066 = vperm.xlu0 %1065, %v256
        %v1067 = vpop.permute.xlu0 %1066
        %v1069 = vadd.f32 %v1064, %v1067
        %v1070 = vadd.f32 %v255, %v1069
        %1071 = vst.msk [vmem:[%s254] sm:$0xf] %vm639, %v1070
        %s1072 = sand.u32 %s120, 1
        %s1073 = scalar_lea.sflag [#allocation4], %s1072
        %s1074 = sand.u32 %s120, 1
        %s1075 = smul.addr %s1074, 4
        %s1076 = scalar_lea.vmem [#allocation10], %s1075
        // Predicated region
        $region53: #{tpu_custom_call.1} parent=35 // pred_check
          %p1077 = pneg %p130
        $region54: #{tpu_custom_call.1} parent=35 // pred_check_branch
          %1079 = sbr.rel (%p1077) target = $region56
        $region55: #{tpu_custom_call.1} parent=35 // pred_region
          %s1081 = ssub.s32 64, 64
          %1082 = vsyncadd %s1073, %s1081
          %s1083 = smul.addr %s23, 64
          %s1084 = scalar_lea.hbm %s4, %s1083
          %s1086 = sshll.u32 %s1076, 4
          %s1087 = int_to_ptr.vmem [resolvable:$true] %s1086
          %1089 = dma.vmem_to_hbm [thread:$0]  %s1087, 64, %s1084, %s1073
        $region56: #{tpu_custom_call.1} parent=35 // pred_fallthru
          _
      $region36: #{tpu_custom_call.1} parent=5 // pred_fallthru
        _
      %p1090 = scmp.le.s32.totalorder 2, %s18
      // Predicated region
      $region57: #{tpu_custom_call.1} parent=5 // pred_check
        %p1091 = pneg %p1090
      $region58: #{tpu_custom_call.1} parent=5 // pred_check_branch
        %1093 = sbr.rel (%p1091) target = $region60
      $region59: #{tpu_custom_call.1} parent=5 // pred_region
        %s1094 = ssub.s32 %s18, 2
        // Predicated region
        $region61: #{tpu_custom_call.1} parent=59 // pred_check
          %p1095 = pneg %p136
        $region62: #{tpu_custom_call.1} parent=59 // pred_check_branch
          %1097 = sbr.rel (%p1095) target = $region64
        $region63: #{tpu_custom_call.1} parent=59 // pred_region
          %s1098 = sand.u32 %s121, 1
          %s1099 = scalar_lea.sflag [#allocation4], %s1098
          %s1100 = sand.u32 %s121, 1
          %s1101 = smul.addr %s1100, 4
          %s1102 = scalar_lea.vmem [#allocation10], %s1101
          %1103 = dma.done %s1099, 64
        $region64: #{tpu_custom_call.1} parent=59 // pred_fallthru
          _
      $region60: #{tpu_custom_call.1} parent=5 // pred_fallthru
        _
    $region6: #{tpu_custom_call.1} parent=1 // loop_footer
      %s22 = sadd.s32 1, %s18
    $region7: #{tpu_custom_call.1} parent=1 // loop_footer_branch
      %17 = sbr.rel target = $region3
    $region8: #{tpu_custom_call.1} parent=1 // loop_exit
      _
    %1104 = vsyncpa [#allocation3], 1
    %s1105 = scalar_lea.sflag [#allocation3], 1
    %1106 = vsyncpa %s1105, 1
    %1107 = vsyncpa [#allocation6], 1
    %1108 = vsyncpa [#allocation9], 1
    %1109 = vsyncpa [#allocation4], 1
    %s1110 = scalar_lea.sflag [#allocation4], 1
    %1111 = vsyncpa %s1110, 1

</llo_original>
